<compile_context>
chip_gen: v7x
topology: tpu7x:2x2x1
jax: 0.10.0
libtpu: 0.0.40
codegen_flags: <defaults>
</compile_context>

<pallas_src>
import math

import jax
import jax.numpy as jnp
from jax.experimental import pallas as pl
from jax.experimental.pallas import tpu as pltpu

BN_EPS = 1e-5


# ---------------------------------------------------------------------------
# VMEM sizing (per chip generation)
# ---------------------------------------------------------------------------
def _tpu_vmem_bytes():
    try:
        return int(pltpu.get_tpu_info().vmem_capacity_bytes)
    except Exception:
        return 64 * 1024 * 1024          # conservative fallback (v7x per-TC size)


def _vmem_limits():
    phys = _tpu_vmem_bytes()
    limit = min(int(phys * 0.75), 100 * 1024 * 1024)   # ~96 MiB v5e/v6e, ~48 MiB v7x
    budget = min(int(phys * 0.50), 80 * 1024 * 1024)   # working-set budget for tiling
    return limit, budget


# ---------------------------------------------------------------------------
# in-kernel helpers
# ---------------------------------------------------------------------------
def _inv_deg(adj):
    """1 / clamp(deg, 1): approx EUP reciprocal + one Newton step (f32-accurate)."""
    deg = jnp.maximum(jnp.sum(adj, axis=-1, keepdims=True), 1.0)
    r = pl.reciprocal(deg, approx=True)
    return r * (2.0 - deg * r)


def _sage_relu(x, adj, inv_deg, wr_ref, wt_ref, b_ref):
    """relu(DenseSAGEConv(x, adj)); two MXU dots, no concat/relayout."""
    tb, n, c = x.shape
    agg = jnp.einsum("bij,bjc->bic", adj, x,
                     preferred_element_type=jnp.float32) * inv_deg
    h = jnp.dot(agg.reshape(tb * n, c), wr_ref[...],
                preferred_element_type=jnp.float32)
    h = h + jnp.dot(x.reshape(tb * n, c), wt_ref[...],
                    preferred_element_type=jnp.float32)
    return jnp.maximum(h + b_ref[...], 0.0)          # [tb*n, Cout]


def _write_partial_stats(stats_ref, h):
    """Per-tile sum / sum-of-squares (one-pass BatchNorm statistics)."""
    s = jnp.sum(h, axis=0, keepdims=True)
    sq = jnp.sum(h * h, axis=0, keepdims=True)
    stats_ref[...] = jnp.concatenate([s, sq], axis=0)[None]        # [1, 2, C]


# ---------------------------------------------------------------------------
# fused single-call kernel (whole problem resident in VMEM)
# ---------------------------------------------------------------------------
def _fused_kernel(x_ref, adj_ref,
                  w1r_ref, w1t_ref, b1_ref, g1_ref, be1_ref,
                  w2r_ref, w2t_ref, b2_ref, g2_ref, be2_ref,
                  w3r_ref, w3t_ref, b3_ref, g3_ref, be3_ref,
                  wl1_ref, wl2_ref, wl3_ref, bl_ref,
                  out_ref):
    x = x_ref[...]
    adj = adj_ref[...].astype(jnp.float32)
    inv = _inv_deg(adj)
    b, n, _ = x.shape

    def bn(h2d, g_ref, be_ref):          # training-mode BN over all B*N rows (two-pass)
        m = jnp.mean(h2d, axis=0, keepdims=True)
        d = h2d - m
        v = jnp.mean(d * d, axis=0, keepdims=True)
        return d * (g_ref[...] * jax.lax.rsqrt(v + BN_EPS)) + be_ref[...]

    h1 = _sage_relu(x, adj, inv, w1r_ref, w1t_ref, b1_ref)
    x1 = bn(h1, g1_ref, be1_ref)
    h2 = _sage_relu(x1.reshape(b, n, -1), adj, inv, w2r_ref, w2t_ref, b2_ref)
    x2 = bn(h2, g2_ref, be2_ref)
    h3 = _sage_relu(x2.reshape(b, n, -1), adj, inv, w3r_ref, w3t_ref, b3_ref)
    x3 = bn(h3, g3_ref, be3_ref)

    y = jnp.dot(x1, wl1_ref[...], preferred_element_type=jnp.float32)
    y = y + jnp.dot(x2, wl2_ref[...], preferred_element_type=jnp.float32)
    y = y + jnp.dot(x3, wl3_ref[...], preferred_element_type=jnp.float32)
    out_ref[...] = jnp.maximum(y + bl_ref[...], 0.0).reshape(b, n, -1)


# ---------------------------------------------------------------------------
# batch-tiled kernels  (grid = (num_batch_tiles,); weights resident)
# ---------------------------------------------------------------------------
def _conv1_kernel(x_ref, adj_ref, wr_ref, wt_ref, b_ref, h_ref, stats_ref):
    adj = adj_ref[...].astype(jnp.float32)
    x = x_ref[...]
    h = _sage_relu(x, adj, _inv_deg(adj), wr_ref, wt_ref, b_ref)
    tb, n, _ = x.shape
    h_ref[...] = h.reshape(tb, n, -1)
    _write_partial_stats(stats_ref, h)


def _conv_body(hin_ref, adj_ref, scale_ref, shift_ref, wr_ref, wt_ref, b_ref,
               wl_ref, h_ref, yp_ref, stats_ref, yp_in_ref=None):
    # apply previous layer's BatchNorm as a precomputed scale/shift, then conv
    xin = hin_ref[...] * scale_ref[...] + shift_ref[...]
    adj = adj_ref[...].astype(jnp.float32)
    h = _sage_relu(xin, adj, _inv_deg(adj), wr_ref, wt_ref, b_ref)
    tb, n, c = xin.shape
    # head-partial epilogue: accumulate x_prev @ Wl_part -> no x1/x2 HBM round trip
    yp = jnp.dot(xin.reshape(tb * n, c), wl_ref[...],
                 preferred_element_type=jnp.float32)
    if yp_in_ref is not None:
        yp = yp + yp_in_ref[...].reshape(tb * n, -1)
    h_ref[...] = h.reshape(tb, n, -1)
    yp_ref[...] = yp.reshape(tb, n, -1)
    _write_partial_stats(stats_ref, h)


def _conv2_kernel(hin_ref, adj_ref, scale_ref, shift_ref, wr_ref, wt_ref, b_ref,
                  wl_ref, h_ref, yp_ref, stats_ref):
    _conv_body(hin_ref, adj_ref, scale_ref, shift_ref, wr_ref, wt_ref, b_ref,
               wl_ref, h_ref, yp_ref, stats_ref)


def _conv3_kernel(hin_ref, adj_ref, yp_in_ref, scale_ref, shift_ref, wr_ref, wt_ref,
                  b_ref, wl_ref, h_ref, yp_ref, stats_ref):
    _conv_body(hin_ref, adj_ref, scale_ref, shift_ref, wr_ref, wt_ref, b_ref,
               wl_ref, h_ref, yp_ref, stats_ref, yp_in_ref=yp_in_ref)


def _final_kernel(h3_ref, yp_ref, scale_ref, shift_ref, wl3_ref, bl_ref, out_ref):
    x3 = h3_ref[...] * scale_ref[...] + shift_ref[...]
    tb, n, c = x3.shape
    y = yp_ref[...].reshape(tb * n, -1) + jnp.dot(
        x3.reshape(tb * n, c), wl3_ref[...], preferred_element_type=jnp.float32)
    out_ref[...] = jnp.maximum(y + bl_ref[...], 0.0).reshape(tb, n, -1)


# ---------------------------------------------------------------------------
# spec / call helpers
# ---------------------------------------------------------------------------
def _tiled(tb, *tail):
    nd = len(tail)
    return pl.BlockSpec((tb,) + tuple(tail), lambda b: (b,) + (0,) * nd)


def _full(shape):
    nd = len(shape)
    return pl.BlockSpec(tuple(shape), lambda *_: (0,) * nd)


def _stats_spec(c):
    return pl.BlockSpec((1, 2, c), lambda b: (b, 0, 0))


def _nbytes(a):
    return math.prod(a.shape) * jnp.dtype(a.dtype).itemsize


def _pallas(kernel, grid, in_specs, out_specs, out_shape, flops, operands, vmem_limit):
    leaves = list(operands) + list(jax.tree_util.tree_leaves(out_shape))
    return pl.pallas_call(
        kernel,
        grid=grid,
        in_specs=in_specs,
        out_specs=out_specs,
        out_shape=out_shape,
        compiler_params=pltpu.CompilerParams(
            dimension_semantics=("parallel",),      # batch tiles across TensorCores
            vmem_limit_bytes=vmem_limit,
        ),
        cost_estimate=pl.CostEstimate(
            flops=int(flops), transcendentals=0,
            bytes_accessed=int(sum(_nbytes(a) for a in leaves))),
    )(*operands)


def _bn_scale_shift(partial_stats, gamma, beta, count):
    """Reduce per-tile [sum, sumsq] partials into BN scale/shift (training mode)."""
    s = partial_stats.sum(axis=0)                  # [2, C]
    mean = s[0] / count
    var = s[1] / count - mean * mean               # biased variance
    scale = gamma * jax.lax.rsqrt(var + BN_EPS)    # [1, C]
    shift = beta - mean * scale                    # [1, C]
    return scale, shift


def _fused_vmem_estimate(B, N, in_c, hid, out_c, adj_isz, weight_bytes):
    # simultaneously-live activations: x, h1/x1, h2/x2, h3/x3, y, agg temp, f32 adj copy
    act = 4 * B * N * (in_c + 4 * hid + 3 * out_c + max(hid, out_c) + N)
    adj_hbm = B * N * N * adj_isz
    return 3 * (act + adj_hbm) + 2 * weight_bytes       # 3x margin for compiler temps


def _pick_batch_tile(B, N, hid, out_c, adj_isz, budget, weight_bytes):
    """Worst-call (conv2/conv3) per-batch-element working set, double-buffered
    inputs AND outputs, plus in-kernel f32 temporaries."""
    cmax = max(hid, out_c)
    per_b = (2 * N * N * adj_isz                    # adj input (x2 buffers)
             + 4 * N * (hid + out_c) * 4            # h/y_p inputs + outputs (x2 each)
             + N * N * 4 + 2 * N * cmax * 4)        # f32 adj cast + agg/h temporaries
    avail = max(budget - 4 * weight_bytes, per_b)
    tb_max = max(1, min(B, avail // per_b))
    if tb_max >= B:
        return B
    divs = [d for d in range(1, B + 1) if B % d == 0 and d <= tb_max]
    even = [d for d in divs if (B // d) % 2 == 0]   # keep both TCs busy (megacore)
    # TODO(synk): prime B collapses to tb=1; a cdiv grid + masked remainder tile
    #             (masking the BN partial sums) would handle that better.
    return max(even) if even else max(divs)


# ---------------------------------------------------------------------------
# forward paths
# ---------------------------------------------------------------------------
def _forward_fused(x, adj_in, ws, out_c, vmem_limit):
    B, N, in_c = x.shape
    hid = ws[0].shape[1]
    operands = (x, adj_in) + tuple(ws)
    flops = (2 * B * N * N * (in_c + 2 * hid)
             + 4 * B * N * (in_c * hid + hid * hid + hid * out_c)
             + 2 * B * N * (2 * hid + out_c) * out_c)
    return pl.pallas_call(
        _fused_kernel,
        grid=(1,),
        in_specs=[_full(a.shape) for a in operands],
        out_specs=_full((B, N, out_c)),
        out_shape=jax.ShapeDtypeStruct((B, N, out_c), jnp.float32),
        compiler_params=pltpu.CompilerParams(
            dimension_semantics=("arbitrary",),
            vmem_limit_bytes=vmem_limit),
        cost_estimate=pl.CostEstimate(
            flops=int(flops), transcendentals=0,
            bytes_accessed=int(sum(_nbytes(a) for a in operands) + B * N * out_c * 4)),
    )(*operands)


def _forward_tiled(x, adj_in, p, wt, tb, vmem_limit):
    (w1r, w1t, w2r, w2t, w3r, w3t, wl1, wl2, wl3) = wt
    B, N, in_c = x.shape
    hid = w1r.shape[1]
    out_c = wl3.shape[1]
    f32 = jnp.float32
    n_tiles = B // tb
    grid = (n_tiles,)
    count = float(B * N)

    adj_spec = _tiled(tb, N, N)
    # TODO(synk): if xprof shows exposed adj DMA at large tb, use
    #             pipeline_mode=pl.Buffered(3) on adj_spec instead of shrinking tb.

    # ---- layer 1: conv1 + relu, per-tile BN partial stats -------------------
    h1, st1 = _pallas(
        _conv1_kernel, grid,
        in_specs=[_tiled(tb, N, in_c), adj_spec,
                  _full(w1r.shape), _full(w1t.shape), _full(p["b1"].shape)],
        out_specs=(_tiled(tb, N, hid), _stats_spec(hid)),
        out_shape=(jax.ShapeDtypeStruct((B, N, hid), f32),
                   jax.ShapeDtypeStruct((n_tiles, 2, hid), f32)),
        flops=2 * B * N * N * in_c + 4 * B * N * in_c * hid,
        operands=(x, adj_in, w1r, w1t, p["b1"]),
        vmem_limit=vmem_limit)
    sc1, sh1 = _bn_scale_shift(st1, p["g1"], p["be1"], count)

    # ---- layer 2: BN1 apply + conv2 + relu + head partial y = x1 @ Wl1 ------
    h2, yp, st2 = _pallas(
        _conv2_kernel, grid,
        in_specs=[_tiled(tb, N, hid), adj_spec, _full(sc1.shape), _full(sh1.shape),
                  _full(w2r.shape), _full(w2t.shape), _full(p["b2"].shape), _full(wl1.shape)],
        out_specs=(_tiled(tb, N, hid), _tiled(tb, N, out_c), _stats_spec(hid)),
        out_shape=(jax.ShapeDtypeStruct((B, N, hid), f32),
                   jax.ShapeDtypeStruct((B, N, out_c), f32),
                   jax.ShapeDtypeStruct((n_tiles, 2, hid), f32)),
        flops=2 * B * N * N * hid + 4 * B * N * hid * hid + 2 * B * N * hid * out_c,
        operands=(h1, adj_in, sc1, sh1, w2r, w2t, p["b2"], wl1),
        vmem_limit=vmem_limit)
    sc2, sh2 = _bn_scale_shift(st2, p["g2"], p["be2"], count)

    # ---- layer 3: BN2 apply + conv3 + relu + head partial y += x2 @ Wl2 -----
    h3, yp, st3 = _pallas(
        _conv3_kernel, grid,
        in_specs=[_tiled(tb, N, hid), adj_spec, _tiled(tb, N, out_c),
                  _full(sc2.shape), _full(sh2.shape),
                  _full(w3r.shape), _full(w3t.shape), _full(p["b3"].shape), _full(wl2.shape)],
        out_specs=(_tiled(tb, N, out_c), _tiled(tb, N, out_c), _stats_spec(out_c)),
        out_shape=(jax.ShapeDtypeStruct((B, N, out_c), f32),
                   jax.ShapeDtypeStruct((B, N, out_c), f32),
                   jax.ShapeDtypeStruct((n_tiles, 2, out_c), f32)),
        flops=2 * B * N * N * hid + 6 * B * N * hid * out_c,
        operands=(h2, adj_in, yp, sc2, sh2, w3r, w3t, p["b3"], wl2),
        vmem_limit=vmem_limit)
    sc3, sh3 = _bn_scale_shift(st3, p["g3"], p["be3"], count)

    # ---- head: BN3 apply + y += x3 @ Wl3 + bias, relu -----------------------
    out = _pallas(
        _final_kernel, grid,
        in_specs=[_tiled(tb, N, out_c), _tiled(tb, N, out_c),
                  _full(sc3.shape), _full(sh3.shape), _full(wl3.shape), _full(p["bl"].shape)],
        out_specs=_tiled(tb, N, out_c),
        out_shape=jax.ShapeDtypeStruct((B, N, out_c), f32),
        flops=2 * B * N * out_c * out_c,
        operands=(h3, yp, sc3, sh3, wl3, p["bl"]),
        vmem_limit=vmem_limit)
    return out


def gnn_forward(x, adj, params, batch_tile=None, adj_bf16=True):
    """DiffPool-GNN forward. batch_tile=None -> auto (fused single kernel when
    the whole problem fits in VMEM, otherwise the batch-tiled 4-call pipeline);
    an explicit batch_tile forces the tiled path with that tile size.
    adj_bf16 stores the adjacency bf16 in HBM (bit-exact for {0,1} adjacency;
    set False for weighted graphs)."""
    B, N, in_c = x.shape
    hid = params["w1_rel"].shape[0]
    out_c = params["wl"].shape[0]
    vmem_limit, vmem_budget = _vmem_limits()

    adj_in = adj.astype(jnp.bfloat16) if adj_bf16 else adj
    adj_isz = jnp.dtype(adj_in.dtype).itemsize

    # Pre-transpose weights to [Cin, Cout]; split the final Linear over the concat.
    w1r, w1t = params["w1_rel"].T, params["w1_root"].T
    w2r, w2t = params["w2_rel"].T, params["w2_root"].T
    w3r, w3t = params["w3_rel"].T, params["w3_root"].T
    wl_t = params["wl"].T                                   # [2*hid+out_c, out_c]
    wl1, wl2, wl3 = wl_t[:hid], wl_t[hid:2 * hid], wl_t[2 * hid:]

    ws = (w1r, w1t, params["b1"], params["g1"], params["be1"],
          w2r, w2t, params["b2"], params["g2"], params["be2"],
          w3r, w3t, params["b3"], params["g3"], params["be3"],
          wl1, wl2, wl3, params["bl"])
    wbytes_all = sum(_nbytes(a) for a in ws)

    if batch_tile is None and \
            _fused_vmem_estimate(B, N, in_c, hid, out_c, adj_isz, wbytes_all) <= vmem_budget:
        return _forward_fused(x, adj_in, ws, out_c, vmem_limit)

    if batch_tile is None:
        conv_wbytes = sum(_nbytes(a) for a in (w2r, w2t, params["b2"], wl1)) + 8 * hid
        tb = _pick_batch_tile(B, N, hid, out_c, adj_isz, vmem_budget, conv_wbytes)
    else:
        tb = batch_tile
    assert B % tb == 0, f"batch_tile={tb} must divide batch={B}"
    return _forward_tiled(x, adj_in, params,
                          (w1r, w1t, w2r, w2t, w3r, w3t, wl1, wl2, wl3),
                          tb, vmem_limit)


# ---------------------------------------------------------------------------
# parameters + pure-JAX reference (for verification)
# ---------------------------------------------------------------------------
def init_params(key, in_c, hid, out_c):
    """Deterministic synthetic parameters (PyTorch Linear-style fan-in uniform)."""
    ks = iter(jax.random.split(key, 16))

    def lin_w(o, i):
        bound = 1.0 / (i ** 0.5)
        return jax.random.uniform(next(ks), (o, i), jnp.float32, -bound, bound)

    def lin_b(o, i):
        bound = 1.0 / (i ** 0.5)
        return jax.random.uniform(next(ks), (1, o), jnp.float32, -bound, bound)

    cat_c = 2 * hid + out_c
    return dict(
        w1_rel=lin_w(hid, in_c), b1=lin_b(hid, in_c), w1_root=lin_w(hid, in_c),
        g1=jnp.ones((1, hid), jnp.float32), be1=jnp.zeros((1, hid), jnp.float32),
        w2_rel=lin_w(hid, hid), b2=lin_b(hid, hid), w2_root=lin_w(hid, hid),
        g2=jnp.ones((1, hid), jnp.float32), be2=jnp.zeros((1, hid), jnp.float32),
        w3_rel=lin_w(out_c, hid), b3=lin_b(out_c, hid), w3_root=lin_w(out_c, hid),
        g3=jnp.ones((1, out_c), jnp.float32), be3=jnp.zeros((1, out_c), jnp.float32),
        wl=lin_w(out_c, cat_c), bl=lin_b(out_c, cat_c),
    )


def gnn_reference(x, adj, p):
    """Pure-JAX reference mirroring the PyTorch forward."""
    deg = jnp.maximum(adj.sum(-1, keepdims=True), 1.0)

    def sage(h, wr, b, wt):
        agg = jnp.einsum("bij,bjc->bic", adj, h) / deg
        return agg @ wr.T + b + h @ wt.T

    def bn(h, g, be):
        flat = h.reshape(-1, h.shape[-1])
        m = flat.mean(0)
        v = ((flat - m) ** 2).mean(0)
        return (h - m) / jnp.sqrt(v + BN_EPS) * g + be

    x1 = bn(jax.nn.relu(sage(x, p["w1_rel"], p["b1"], p["w1_root"])), p["g1"], p["be1"])
    x2 = bn(jax.nn.relu(sage(x1, p["w2_rel"], p["b2"], p["w2_root"])), p["g2"], p["be2"])
    x3 = bn(jax.nn.relu(sage(x2, p["w3_rel"], p["b3"], p["w3_root"])), p["g3"], p["be3"])
    cat = jnp.concatenate([x1, x2, x3], axis=-1)
    return jax.nn.relu(cat @ p["wl"].T + p["bl"])


if __name__ == "__main__":
    B, N, IN_C, HID, OUT_C = 2, 16, 4, 32, 16

    key = jax.random.PRNGKey(0)
    kx, ka, kp = jax.random.split(key, 3)
    x = jax.random.normal(kx, (B, N, IN_C), jnp.float32)
    adj = (jax.random.uniform(ka, (B, N, N)) > 0.5).astype(jnp.float32)
    adj = jnp.maximum(adj, jnp.transpose(adj, (0, 2, 1)))   # symmetric {0,1} adjacency

    params = init_params(kp, IN_C, HID, OUT_C)
    ref = gnn_reference(x, adj, params)

    # 1) default path: whole problem fits in VMEM -> single fused kernel, grid=(1,)
    fused = jax.jit(lambda xx, aa, pp: gnn_forward(xx, aa, pp))
    out = fused(x, adj, params)
    jax.block_until_ready(out)
    assert out.shape == (B, N, OUT_C)
    err = float(jnp.max(jnp.abs(out - ref)))
    assert jnp.allclose(out, ref, atol=2e-4, rtol=2e-4), err

    # 2) tiled path (batch_tile=1 -> grid=(2,)): exercises batch pipelining,
    #    bf16-adj streaming, head-partial epilogue and cross-tile BN statistics.
    tiled = jax.jit(lambda xx, aa, pp: gnn_forward(xx, aa, pp, batch_tile=1))
    out2 = tiled(x, adj, params)
    jax.block_until_ready(out2)
    err2 = float(jnp.max(jnp.abs(out2 - ref)))
    assert jnp.allclose(out2, ref, atol=2e-4, rtol=2e-4), err2

    print("KERNEL_OK")
</pallas_src>

<mosaic_0001>
module attributes {stable_mosaic.version = 11 : i64} {
  func.func @_fused_kernel(%arg0: i32, %arg1: memref<2x16x4xf32, #tpu.memory_space<vmem>>, %arg2: memref<2x16x16xbf16, #tpu.memory_space<vmem>>, %arg3: memref<4x32xf32, #tpu.memory_space<vmem>>, %arg4: memref<4x32xf32, #tpu.memory_space<vmem>>, %arg5: memref<1x32xf32, #tpu.memory_space<vmem>>, %arg6: memref<1x32xf32, #tpu.memory_space<vmem>>, %arg7: memref<1x32xf32, #tpu.memory_space<vmem>>, %arg8: memref<32x32xf32, #tpu.memory_space<vmem>>, %arg9: memref<32x32xf32, #tpu.memory_space<vmem>>, %arg10: memref<1x32xf32, #tpu.memory_space<vmem>>, %arg11: memref<1x32xf32, #tpu.memory_space<vmem>>, %arg12: memref<1x32xf32, #tpu.memory_space<vmem>>, %arg13: memref<32x16xf32, #tpu.memory_space<vmem>>, %arg14: memref<32x16xf32, #tpu.memory_space<vmem>>, %arg15: memref<1x16xf32, #tpu.memory_space<vmem>>, %arg16: memref<1x16xf32, #tpu.memory_space<vmem>>, %arg17: memref<1x16xf32, #tpu.memory_space<vmem>>, %arg18: memref<32x16xf32, #tpu.memory_space<vmem>>, %arg19: memref<32x16xf32, #tpu.memory_space<vmem>>, %arg20: memref<16x16xf32, #tpu.memory_space<vmem>>, %arg21: memref<1x16xf32, #tpu.memory_space<vmem>>, %arg22: memref<2x16x16xf32, #tpu.memory_space<vmem>>) attributes {dimension_semantics = [#tpu.dimension_semantics<arbitrary>], iteration_bounds = array<i64: 1>, scalar_prefetch = 0 : i64, scratch_operands = 0 : i64, tpu.core_type = #tpu.core_type<tc>, window_params = [{pipeline_mode = #tpu.pipeline_mode<synchronous>, transform_indices = @transform_0, window_bounds = array<i64: 2, 16, 4>}, {pipeline_mode = #tpu.pipeline_mode<synchronous>, transform_indices = @transform_1, window_bounds = array<i64: 2, 16, 16>}, {pipeline_mode = #tpu.pipeline_mode<synchronous>, transform_indices = @transform_2, window_bounds = array<i64: 4, 32>}, {pipeline_mode = #tpu.pipeline_mode<synchronous>, transform_indices = @transform_3, window_bounds = array<i64: 4, 32>}, {pipeline_mode = #tpu.pipeline_mode<synchronous>, transform_indices = @transform_4, window_bounds = array<i64: 1, 32>}, {pipeline_mode = #tpu.pipeline_mode<synchronous>, transform_indices = @transform_5, window_bounds = array<i64: 1, 32>}, {pipeline_mode = #tpu.pipeline_mode<synchronous>, transform_indices = @transform_6, window_bounds = array<i64: 1, 32>}, {pipeline_mode = #tpu.pipeline_mode<synchronous>, transform_indices = @transform_7, window_bounds = array<i64: 32, 32>}, {pipeline_mode = #tpu.pipeline_mode<synchronous>, transform_indices = @transform_8, window_bounds = array<i64: 32, 32>}, {pipeline_mode = #tpu.pipeline_mode<synchronous>, transform_indices = @transform_9, window_bounds = array<i64: 1, 32>}, {pipeline_mode = #tpu.pipeline_mode<synchronous>, transform_indices = @transform_10, window_bounds = array<i64: 1, 32>}, {pipeline_mode = #tpu.pipeline_mode<synchronous>, transform_indices = @transform_11, window_bounds = array<i64: 1, 32>}, {pipeline_mode = #tpu.pipeline_mode<synchronous>, transform_indices = @transform_12, window_bounds = array<i64: 32, 16>}, {pipeline_mode = #tpu.pipeline_mode<synchronous>, transform_indices = @transform_13, window_bounds = array<i64: 32, 16>}, {pipeline_mode = #tpu.pipeline_mode<synchronous>, transform_indices = @transform_14, window_bounds = array<i64: 1, 16>}, {pipeline_mode = #tpu.pipeline_mode<synchronous>, transform_indices = @transform_15, window_bounds = array<i64: 1, 16>}, {pipeline_mode = #tpu.pipeline_mode<synchronous>, transform_indices = @transform_16, window_bounds = array<i64: 1, 16>}, {pipeline_mode = #tpu.pipeline_mode<synchronous>, transform_indices = @transform_17, window_bounds = array<i64: 32, 16>}, {pipeline_mode = #tpu.pipeline_mode<synchronous>, transform_indices = @transform_18, window_bounds = array<i64: 32, 16>}, {pipeline_mode = #tpu.pipeline_mode<synchronous>, transform_indices = @transform_19, window_bounds = array<i64: 16, 16>}, {pipeline_mode = #tpu.pipeline_mode<synchronous>, transform_indices = @transform_20, window_bounds = array<i64: 1, 16>}, {pipeline_mode = #tpu.pipeline_mode<synchronous>, transform_indices = @transform_21, window_bounds = array<i64: 2, 16, 16>}]} {
    %c0 = arith.constant 0 : index
    %c0_0 = arith.constant 0 : index
    %c0_1 = arith.constant 0 : index
    %0 = vector.load %arg1[%c0, %c0_0, %c0_1] : memref<2x16x4xf32, #tpu.memory_space<vmem>>, vector<2x16x4xf32>
    %c0_2 = arith.constant 0 : index
    %c0_3 = arith.constant 0 : index
    %c0_4 = arith.constant 0 : index
    %1 = vector.load %arg2[%c0_2, %c0_3, %c0_4] : memref<2x16x16xbf16, #tpu.memory_space<vmem>>, vector<2x16x16xbf16>
    %2 = arith.extf %1 : vector<2x16x16xbf16> to vector<2x16x16xf32>
    %cst = arith.constant dense<0.000000e+00> : vector<2x16xf32>
    %3 = vector.multi_reduction <add>, %2, %cst [2] : vector<2x16x16xf32> to vector<2x16xf32>
    %4 = vector.shape_cast %3 : vector<2x16xf32> to vector<2x16x1xf32>
    %cst_5 = arith.constant 1.000000e+00 : f32
    %5 = vector.broadcast %cst_5 : f32 to vector<2x16x1xf32>
    %6 = arith.maximumf %4, %5 : vector<2x16x1xf32>
    %7 = tpu.reciprocal %6 {approx = true} : vector<2x16x1xf32> -> vector<2x16x1xf32>
    %8 = arith.mulf %6, %7 : vector<2x16x1xf32>
    %cst_6 = arith.constant 2.000000e+00 : f32
    %9 = vector.broadcast %cst_6 : f32 to vector<2x16x1xf32>
    %10 = arith.subf %9, %8 : vector<2x16x1xf32>
    %11 = arith.mulf %7, %10 : vector<2x16x1xf32>
    "tpu.trace_start"() <{level = 10 : i32, message = "bij,bjc->bic"}> : () -> ()
    %cst_7 = arith.constant dense<0.000000e+00> : vector<2x16x4xf32>
    %12 = tpu.matmul %2, %0, %cst_7 {dimension_numbers = #tpu.dot_dimension_numbers<[2], [1], [1], [2], [0, 0, 0, 1, 1, 2], [0], [0]>} : vector<2x16x16xf32>, vector<2x16x4xf32>, vector<2x16x4xf32> -> vector<2x16x4xf32>
    "tpu.trace_stop"() : () -> ()
    %13 = vector.broadcast %11 : vector<2x16x1xf32> to vector<2x16x4xf32>
    %14 = arith.mulf %12, %13 : vector<2x16x4xf32>
    %15 = vector.shape_cast %14 : vector<2x16x4xf32> to vector<32x4xf32>
    %c0_8 = arith.constant 0 : index
    %c0_9 = arith.constant 0 : index
    %16 = vector.load %arg3[%c0_8, %c0_9] : memref<4x32xf32, #tpu.memory_space<vmem>>, vector<4x32xf32>
    %cst_10 = arith.constant dense<0.000000e+00> : vector<32x32xf32>
    %17 = tpu.matmul %15, %16, %cst_10 {dimension_numbers = #tpu.dot_dimension_numbers<[1], [0], [0], [1], [0, 0, 1, 1], [], []>} : vector<32x4xf32>, vector<4x32xf32>, vector<32x32xf32> -> vector<32x32xf32>
    %18 = vector.shape_cast %0 : vector<2x16x4xf32> to vector<32x4xf32>
    %c0_11 = arith.constant 0 : index
    %c0_12 = arith.constant 0 : index
    %19 = vector.load %arg4[%c0_11, %c0_12] : memref<4x32xf32, #tpu.memory_space<vmem>>, vector<4x32xf32>
    %cst_13 = arith.constant dense<0.000000e+00> : vector<32x32xf32>
    %20 = tpu.matmul %18, %19, %cst_13 {dimension_numbers = #tpu.dot_dimension_numbers<[1], [0], [0], [1], [0, 0, 1, 1], [], []>} : vector<32x4xf32>, vector<4x32xf32>, vector<32x32xf32> -> vector<32x32xf32>
    %21 = arith.addf %17, %20 : vector<32x32xf32>
    %c0_14 = arith.constant 0 : index
    %c0_15 = arith.constant 0 : index
    %22 = vector.load %arg5[%c0_14, %c0_15] : memref<1x32xf32, #tpu.memory_space<vmem>>, vector<1x32xf32>
    %23 = vector.broadcast %22 : vector<1x32xf32> to vector<32x32xf32>
    %24 = arith.addf %21, %23 : vector<32x32xf32>
    %cst_16 = arith.constant 0.000000e+00 : f32
    %25 = vector.broadcast %cst_16 : f32 to vector<32x32xf32>
    %26 = arith.maximumf %24, %25 : vector<32x32xf32>
    %cst_17 = arith.constant dense<0.000000e+00> : vector<32xf32>
    %27 = vector.multi_reduction <add>, %26, %cst_17 [0] : vector<32x32xf32> to vector<32xf32>
    %28 = vector.shape_cast %27 : vector<32xf32> to vector<1x32xf32>
    %cst_18 = arith.constant 3.200000e+01 : f32
    %29 = vector.broadcast %cst_18 : f32 to vector<1x32xf32>
    %30 = arith.divf %28, %29 : vector<1x32xf32>
    %31 = vector.broadcast %30 : vector<1x32xf32> to vector<32x32xf32>
    %32 = arith.subf %26, %31 : vector<32x32xf32>
    %33 = arith.mulf %32, %32 : vector<32x32xf32>
    %cst_19 = arith.constant dense<0.000000e+00> : vector<32xf32>
    %34 = vector.multi_reduction <add>, %33, %cst_19 [0] : vector<32x32xf32> to vector<32xf32>
    %35 = vector.shape_cast %34 : vector<32xf32> to vector<1x32xf32>
    %cst_20 = arith.constant 3.200000e+01 : f32
    %36 = vector.broadcast %cst_20 : f32 to vector<1x32xf32>
    %37 = arith.divf %35, %36 : vector<1x32xf32>
    %c0_21 = arith.constant 0 : index
    %c0_22 = arith.constant 0 : index
    %38 = vector.load %arg6[%c0_21, %c0_22] : memref<1x32xf32, #tpu.memory_space<vmem>>, vector<1x32xf32>
    %cst_23 = arith.constant 9.99999974E-6 : f32
    %39 = vector.broadcast %cst_23 : f32 to vector<1x32xf32>
    %40 = arith.addf %37, %39 : vector<1x32xf32>
    %41 = math.rsqrt %40 : vector<1x32xf32>
    %42 = arith.mulf %38, %41 : vector<1x32xf32>
    %43 = vector.broadcast %42 : vector<1x32xf32> to vector<32x32xf32>
    %44 = arith.mulf %32, %43 : vector<32x32xf32>
    %c0_24 = arith.constant 0 : index
    %c0_25 = arith.constant 0 : index
    %45 = vector.load %arg7[%c0_24, %c0_25] : memref<1x32xf32, #tpu.memory_space<vmem>>, vector<1x32xf32>
    %46 = vector.broadcast %45 : vector<1x32xf32> to vector<32x32xf32>
    %47 = arith.addf %44, %46 : vector<32x32xf32>
    %48 = vector.shape_cast %47 : vector<32x32xf32> to vector<2x16x32xf32>
    "tpu.trace_start"() <{level = 10 : i32, message = "bij,bjc->bic"}> : () -> ()
    %cst_26 = arith.constant dense<0.000000e+00> : vector<2x16x32xf32>
    %49 = tpu.matmul %2, %48, %cst_26 {dimension_numbers = #tpu.dot_dimension_numbers<[2], [1], [1], [2], [0, 0, 0, 1, 1, 2], [0], [0]>} : vector<2x16x16xf32>, vector<2x16x32xf32>, vector<2x16x32xf32> -> vector<2x16x32xf32>
    "tpu.trace_stop"() : () -> ()
    %50 = vector.broadcast %11 : vector<2x16x1xf32> to vector<2x16x32xf32>
    %51 = arith.mulf %49, %50 : vector<2x16x32xf32>
    %52 = vector.shape_cast %51 : vector<2x16x32xf32> to vector<32x32xf32>
    %c0_27 = arith.constant 0 : index
    %c0_28 = arith.constant 0 : index
    %53 = vector.load %arg8[%c0_27, %c0_28] : memref<32x32xf32, #tpu.memory_space<vmem>>, vector<32x32xf32>
    %cst_29 = arith.constant dense<0.000000e+00> : vector<32x32xf32>
    %54 = tpu.matmul %52, %53, %cst_29 {dimension_numbers = #tpu.dot_dimension_numbers<[1], [0], [0], [1], [0, 0, 1, 1], [], []>} : vector<32x32xf32>, vector<32x32xf32>, vector<32x32xf32> -> vector<32x32xf32>
    %55 = vector.shape_cast %48 : vector<2x16x32xf32> to vector<32x32xf32>
    %c0_30 = arith.constant 0 : index
    %c0_31 = arith.constant 0 : index
    %56 = vector.load %arg9[%c0_30, %c0_31] : memref<32x32xf32, #tpu.memory_space<vmem>>, vector<32x32xf32>
    %cst_32 = arith.constant dense<0.000000e+00> : vector<32x32xf32>
    %57 = tpu.matmul %55, %56, %cst_32 {dimension_numbers = #tpu.dot_dimension_numbers<[1], [0], [0], [1], [0, 0, 1, 1], [], []>} : vector<32x32xf32>, vector<32x32xf32>, vector<32x32xf32> -> vector<32x32xf32>
    %58 = arith.addf %54, %57 : vector<32x32xf32>
    %c0_33 = arith.constant 0 : index
    %c0_34 = arith.constant 0 : index
    %59 = vector.load %arg10[%c0_33, %c0_34] : memref<1x32xf32, #tpu.memory_space<vmem>>, vector<1x32xf32>
    %60 = vector.broadcast %59 : vector<1x32xf32> to vector<32x32xf32>
    %61 = arith.addf %58, %60 : vector<32x32xf32>
    %cst_35 = arith.constant 0.000000e+00 : f32
    %62 = vector.broadcast %cst_35 : f32 to vector<32x32xf32>
    %63 = arith.maximumf %61, %62 : vector<32x32xf32>
    %cst_36 = arith.constant dense<0.000000e+00> : vector<32xf32>
    %64 = vector.multi_reduction <add>, %63, %cst_36 [0] : vector<32x32xf32> to vector<32xf32>
    %65 = vector.shape_cast %64 : vector<32xf32> to vector<1x32xf32>
    %cst_37 = arith.constant 3.200000e+01 : f32
    %66 = vector.broadcast %cst_37 : f32 to vector<1x32xf32>
    %67 = arith.divf %65, %66 : vector<1x32xf32>
    %68 = vector.broadcast %67 : vector<1x32xf32> to vector<32x32xf32>
    %69 = arith.subf %63, %68 : vector<32x32xf32>
    %70 = arith.mulf %69, %69 : vector<32x32xf32>
    %cst_38 = arith.constant dense<0.000000e+00> : vector<32xf32>
    %71 = vector.multi_reduction <add>, %70, %cst_38 [0] : vector<32x32xf32> to vector<32xf32>
    %72 = vector.shape_cast %71 : vector<32xf32> to vector<1x32xf32>
    %cst_39 = arith.constant 3.200000e+01 : f32
    %73 = vector.broadcast %cst_39 : f32 to vector<1x32xf32>
    %74 = arith.divf %72, %73 : vector<1x32xf32>
    %c0_40 = arith.constant 0 : index
    %c0_41 = arith.constant 0 : index
    %75 = vector.load %arg11[%c0_40, %c0_41] : memref<1x32xf32, #tpu.memory_space<vmem>>, vector<1x32xf32>
    %cst_42 = arith.constant 9.99999974E-6 : f32
    %76 = vector.broadcast %cst_42 : f32 to vector<1x32xf32>
    %77 = arith.addf %74, %76 : vector<1x32xf32>
    %78 = math.rsqrt %77 : vector<1x32xf32>
    %79 = arith.mulf %75, %78 : vector<1x32xf32>
    %80 = vector.broadcast %79 : vector<1x32xf32> to vector<32x32xf32>
    %81 = arith.mulf %69, %80 : vector<32x32xf32>
    %c0_43 = arith.constant 0 : index
    %c0_44 = arith.constant 0 : index
    %82 = vector.load %arg12[%c0_43, %c0_44] : memref<1x32xf32, #tpu.memory_space<vmem>>, vector<1x32xf32>
    %83 = vector.broadcast %82 : vector<1x32xf32> to vector<32x32xf32>
    %84 = arith.addf %81, %83 : vector<32x32xf32>
    %85 = vector.shape_cast %84 : vector<32x32xf32> to vector<2x16x32xf32>
    "tpu.trace_start"() <{level = 10 : i32, message = "bij,bjc->bic"}> : () -> ()
    %cst_45 = arith.constant dense<0.000000e+00> : vector<2x16x32xf32>
    %86 = tpu.matmul %2, %85, %cst_45 {dimension_numbers = #tpu.dot_dimension_numbers<[2], [1], [1], [2], [0, 0, 0, 1, 1, 2], [0], [0]>} : vector<2x16x16xf32>, vector<2x16x32xf32>, vector<2x16x32xf32> -> vector<2x16x32xf32>
    "tpu.trace_stop"() : () -> ()
    %87 = vector.broadcast %11 : vector<2x16x1xf32> to vector<2x16x32xf32>
    %88 = arith.mulf %86, %87 : vector<2x16x32xf32>
    %89 = vector.shape_cast %88 : vector<2x16x32xf32> to vector<32x32xf32>
    %c0_46 = arith.constant 0 : index
    %c0_47 = arith.constant 0 : index
    %90 = vector.load %arg13[%c0_46, %c0_47] : memref<32x16xf32, #tpu.memory_space<vmem>>, vector<32x16xf32>
    %cst_48 = arith.constant dense<0.000000e+00> : vector<32x16xf32>
    %91 = tpu.matmul %89, %90, %cst_48 {dimension_numbers = #tpu.dot_dimension_numbers<[1], [0], [0], [1], [0, 0, 1, 1], [], []>} : vector<32x32xf32>, vector<32x16xf32>, vector<32x16xf32> -> vector<32x16xf32>
    %92 = vector.shape_cast %85 : vector<2x16x32xf32> to vector<32x32xf32>
    %c0_49 = arith.constant 0 : index
    %c0_50 = arith.constant 0 : index
    %93 = vector.load %arg14[%c0_49, %c0_50] : memref<32x16xf32, #tpu.memory_space<vmem>>, vector<32x16xf32>
    %cst_51 = arith.constant dense<0.000000e+00> : vector<32x16xf32>
    %94 = tpu.matmul %92, %93, %cst_51 {dimension_numbers = #tpu.dot_dimension_numbers<[1], [0], [0], [1], [0, 0, 1, 1], [], []>} : vector<32x32xf32>, vector<32x16xf32>, vector<32x16xf32> -> vector<32x16xf32>
    %95 = arith.addf %91, %94 : vector<32x16xf32>
    %c0_52 = arith.constant 0 : index
    %c0_53 = arith.constant 0 : index
    %96 = vector.load %arg15[%c0_52, %c0_53] : memref<1x16xf32, #tpu.memory_space<vmem>>, vector<1x16xf32>
    %97 = vector.broadcast %96 : vector<1x16xf32> to vector<32x16xf32>
    %98 = arith.addf %95, %97 : vector<32x16xf32>
    %cst_54 = arith.constant 0.000000e+00 : f32
    %99 = vector.broadcast %cst_54 : f32 to vector<32x16xf32>
    %100 = arith.maximumf %98, %99 : vector<32x16xf32>
    %cst_55 = arith.constant dense<0.000000e+00> : vector<16xf32>
    %101 = vector.multi_reduction <add>, %100, %cst_55 [0] : vector<32x16xf32> to vector<16xf32>
    %102 = vector.shape_cast %101 : vector<16xf32> to vector<1x16xf32>
    %cst_56 = arith.constant 3.200000e+01 : f32
    %103 = vector.broadcast %cst_56 : f32 to vector<1x16xf32>
    %104 = arith.divf %102, %103 : vector<1x16xf32>
    %105 = vector.broadcast %104 : vector<1x16xf32> to vector<32x16xf32>
    %106 = arith.subf %100, %105 : vector<32x16xf32>
    %107 = arith.mulf %106, %106 : vector<32x16xf32>
    %cst_57 = arith.constant dense<0.000000e+00> : vector<16xf32>
    %108 = vector.multi_reduction <add>, %107, %cst_57 [0] : vector<32x16xf32> to vector<16xf32>
    %109 = vector.shape_cast %108 : vector<16xf32> to vector<1x16xf32>
    %cst_58 = arith.constant 3.200000e+01 : f32
    %110 = vector.broadcast %cst_58 : f32 to vector<1x16xf32>
    %111 = arith.divf %109, %110 : vector<1x16xf32>
    %c0_59 = arith.constant 0 : index
    %c0_60 = arith.constant 0 : index
    %112 = vector.load %arg16[%c0_59, %c0_60] : memref<1x16xf32, #tpu.memory_space<vmem>>, vector<1x16xf32>
    %cst_61 = arith.constant 9.99999974E-6 : f32
    %113 = vector.broadcast %cst_61 : f32 to vector<1x16xf32>
    %114 = arith.addf %111, %113 : vector<1x16xf32>
    %115 = math.rsqrt %114 : vector<1x16xf32>
    %116 = arith.mulf %112, %115 : vector<1x16xf32>
    %117 = vector.broadcast %116 : vector<1x16xf32> to vector<32x16xf32>
    %118 = arith.mulf %106, %117 : vector<32x16xf32>
    %c0_62 = arith.constant 0 : index
    %c0_63 = arith.constant 0 : index
    %119 = vector.load %arg17[%c0_62, %c0_63] : memref<1x16xf32, #tpu.memory_space<vmem>>, vector<1x16xf32>
    %120 = vector.broadcast %119 : vector<1x16xf32> to vector<32x16xf32>
    %121 = arith.addf %118, %120 : vector<32x16xf32>
    %c0_64 = arith.constant 0 : index
    %c0_65 = arith.constant 0 : index
    %122 = vector.load %arg18[%c0_64, %c0_65] : memref<32x16xf32, #tpu.memory_space<vmem>>, vector<32x16xf32>
    %cst_66 = arith.constant dense<0.000000e+00> : vector<32x16xf32>
    %123 = tpu.matmul %47, %122, %cst_66 {dimension_numbers = #tpu.dot_dimension_numbers<[1], [0], [0], [1], [0, 0, 1, 1], [], []>} : vector<32x32xf32>, vector<32x16xf32>, vector<32x16xf32> -> vector<32x16xf32>
    %c0_67 = arith.constant 0 : index
    %c0_68 = arith.constant 0 : index
    %124 = vector.load %arg19[%c0_67, %c0_68] : memref<32x16xf32, #tpu.memory_space<vmem>>, vector<32x16xf32>
    %cst_69 = arith.constant dense<0.000000e+00> : vector<32x16xf32>
    %125 = tpu.matmul %84, %124, %cst_69 {dimension_numbers = #tpu.dot_dimension_numbers<[1], [0], [0], [1], [0, 0, 1, 1], [], []>} : vector<32x32xf32>, vector<32x16xf32>, vector<32x16xf32> -> vector<32x16xf32>
    %126 = arith.addf %123, %125 : vector<32x16xf32>
    %c0_70 = arith.constant 0 : index
    %c0_71 = arith.constant 0 : index
    %127 = vector.load %arg20[%c0_70, %c0_71] : memref<16x16xf32, #tpu.memory_space<vmem>>, vector<16x16xf32>
    %cst_72 = arith.constant dense<0.000000e+00> : vector<32x16xf32>
    %128 = tpu.matmul %121, %127, %cst_72 {dimension_numbers = #tpu.dot_dimension_numbers<[1], [0], [0], [1], [0, 0, 1, 1], [], []>} : vector<32x16xf32>, vector<16x16xf32>, vector<32x16xf32> -> vector<32x16xf32>
    %129 = arith.addf %126, %128 : vector<32x16xf32>
    %c0_73 = arith.constant 0 : index
    %c0_74 = arith.constant 0 : index
    %130 = vector.load %arg21[%c0_73, %c0_74] : memref<1x16xf32, #tpu.memory_space<vmem>>, vector<1x16xf32>
    %131 = vector.broadcast %130 : vector<1x16xf32> to vector<32x16xf32>
    %132 = arith.addf %129, %131 : vector<32x16xf32>
    %cst_75 = arith.constant 0.000000e+00 : f32
    %133 = vector.broadcast %cst_75 : f32 to vector<32x16xf32>
    %134 = arith.maximumf %132, %133 : vector<32x16xf32>
    %135 = vector.shape_cast %134 : vector<32x16xf32> to vector<2x16x16xf32>
    %c0_76 = arith.constant 0 : index
    %c0_77 = arith.constant 0 : index
    %c0_78 = arith.constant 0 : index
    %136 = vector.load %arg22[%c0_76, %c0_77, %c0_78] : memref<2x16x16xf32, #tpu.memory_space<vmem>>, vector<2x16x16xf32>
    tpu.vector_store %arg22[%c0_76, %c0_77, %c0_78], %135 {strides = array<i32>} : memref<2x16x16xf32, #tpu.memory_space<vmem>>, vector<2x16x16xf32>,
    return
  }
  func.func @transform_0(%arg0: i32) -> (i32, i32, i32) {
    %c0_i32 = arith.constant 0 : i32
    %c0_i32_0 = arith.constant 0 : i32
    %c0_i32_1 = arith.constant 0 : i32
    %c0_i32_2 = arith.constant 0 : i32
    return %c0_i32, %c0_i32_0, %c0_i32_1 : i32, i32, i32
  }
  func.func @transform_1(%arg0: i32) -> (i32, i32, i32) {
    %c0_i32 = arith.constant 0 : i32
    %c0_i32_0 = arith.constant 0 : i32
    %c0_i32_1 = arith.constant 0 : i32
    %c0_i32_2 = arith.constant 0 : i32
    return %c0_i32, %c0_i32_0, %c0_i32_1 : i32, i32, i32
  }
  func.func @transform_2(%arg0: i32) -> (i32, i32) {
    %c0_i32 = arith.constant 0 : i32
    %c0_i32_0 = arith.constant 0 : i32
    %c0_i32_1 = arith.constant 0 : i32
    return %c0_i32, %c0_i32_0 : i32, i32
  }
  func.func @transform_3(%arg0: i32) -> (i32, i32) {
    %c0_i32 = arith.constant 0 : i32
    %c0_i32_0 = arith.constant 0 : i32
    %c0_i32_1 = arith.constant 0 : i32
    return %c0_i32, %c0_i32_0 : i32, i32
  }
  func.func @transform_4(%arg0: i32) -> (i32, i32) {
    %c0_i32 = arith.constant 0 : i32
    %c0_i32_0 = arith.constant 0 : i32
    %c0_i32_1 = arith.constant 0 : i32
    return %c0_i32, %c0_i32_0 : i32, i32
  }
  func.func @transform_5(%arg0: i32) -> (i32, i32) {
    %c0_i32 = arith.constant 0 : i32
    %c0_i32_0 = arith.constant 0 : i32
    %c0_i32_1 = arith.constant 0 : i32
    return %c0_i32, %c0_i32_0 : i32, i32
  }
  func.func @transform_6(%arg0: i32) -> (i32, i32) {
    %c0_i32 = arith.constant 0 : i32
    %c0_i32_0 = arith.constant 0 : i32
    %c0_i32_1 = arith.constant 0 : i32
    return %c0_i32, %c0_i32_0 : i32, i32
  }
  func.func @transform_7(%arg0: i32) -> (i32, i32) {
    %c0_i32 = arith.constant 0 : i32
    %c0_i32_0 = arith.constant 0 : i32
    %c0_i32_1 = arith.constant 0 : i32
    return %c0_i32, %c0_i32_0 : i32, i32
  }
  func.func @transform_8(%arg0: i32) -> (i32, i32) {
    %c0_i32 = arith.constant 0 : i32
    %c0_i32_0 = arith.constant 0 : i32
    %c0_i32_1 = arith.constant 0 : i32
    return %c0_i32, %c0_i32_0 : i32, i32
  }
  func.func @transform_9(%arg0: i32) -> (i32, i32) {
    %c0_i32 = arith.constant 0 : i32
    %c0_i32_0 = arith.constant 0 : i32
    %c0_i32_1 = arith.constant 0 : i32
    return %c0_i32, %c0_i32_0 : i32, i32
  }
  func.func @transform_10(%arg0: i32) -> (i32, i32) {
    %c0_i32 = arith.constant 0 : i32
    %c0_i32_0 = arith.constant 0 : i32
    %c0_i32_1 = arith.constant 0 : i32
    return %c0_i32, %c0_i32_0 : i32, i32
  }
  func.func @transform_11(%arg0: i32) -> (i32, i32) {
    %c0_i32 = arith.constant 0 : i32
    %c0_i32_0 = arith.constant 0 : i32
    %c0_i32_1 = arith.constant 0 : i32
    return %c0_i32, %c0_i32_0 : i32, i32
  }
  func.func @transform_12(%arg0: i32) -> (i32, i32) {
    %c0_i32 = arith.constant 0 : i32
    %c0_i32_0 = arith.constant 0 : i32
    %c0_i32_1 = arith.constant 0 : i32
    return %c0_i32, %c0_i32_0 : i32, i32
  }
  func.func @transform_13(%arg0: i32) -> (i32, i32) {
    %c0_i32 = arith.constant 0 : i32
    %c0_i32_0 = arith.constant 0 : i32
    %c0_i32_1 = arith.constant 0 : i32
    return %c0_i32, %c0_i32_0 : i32, i32
  }
  func.func @transform_14(%arg0: i32) -> (i32, i32) {
    %c0_i32 = arith.constant 0 : i32
    %c0_i32_0 = arith.constant 0 : i32
    %c0_i32_1 = arith.constant 0 : i32
    return %c0_i32, %c0_i32_0 : i32, i32
  }
  func.func @transform_15(%arg0: i32) -> (i32, i32) {
    %c0_i32 = arith.constant 0 : i32
    %c0_i32_0 = arith.constant 0 : i32
    %c0_i32_1 = arith.constant 0 : i32
    return %c0_i32, %c0_i32_0 : i32, i32
  }
  func.func @transform_16(%arg0: i32) -> (i32, i32) {
    %c0_i32 = arith.constant 0 : i32
    %c0_i32_0 = arith.constant 0 : i32
    %c0_i32_1 = arith.constant 0 : i32
    return %c0_i32, %c0_i32_0 : i32, i32
  }
  func.func @transform_17(%arg0: i32) -> (i32, i32) {
    %c0_i32 = arith.constant 0 : i32
    %c0_i32_0 = arith.constant 0 : i32
    %c0_i32_1 = arith.constant 0 : i32
    return %c0_i32, %c0_i32_0 : i32, i32
  }
  func.func @transform_18(%arg0: i32) -> (i32, i32) {
    %c0_i32 = arith.constant 0 : i32
    %c0_i32_0 = arith.constant 0 : i32
    %c0_i32_1 = arith.constant 0 : i32
    return %c0_i32, %c0_i32_0 : i32, i32
  }
  func.func @transform_19(%arg0: i32) -> (i32, i32) {
    %c0_i32 = arith.constant 0 : i32
    %c0_i32_0 = arith.constant 0 : i32
    %c0_i32_1 = arith.constant 0 : i32
    return %c0_i32, %c0_i32_0 : i32, i32
  }
  func.func @transform_20(%arg0: i32) -> (i32, i32) {
    %c0_i32 = arith.constant 0 : i32
    %c0_i32_0 = arith.constant 0 : i32
    %c0_i32_1 = arith.constant 0 : i32
    return %c0_i32, %c0_i32_0 : i32, i32
  }
  func.func @transform_21(%arg0: i32) -> (i32, i32, i32) {
    %c0_i32 = arith.constant 0 : i32
    %c0_i32_0 = arith.constant 0 : i32
    %c0_i32_1 = arith.constant 0 : i32
    %c0_i32_2 = arith.constant 0 : i32
    return %c0_i32, %c0_i32_0, %c0_i32_1 : i32, i32, i32
  }
}

</mosaic_0001>

<llo_original>
// kernel: _lambda_.1
$region0: #{_lambda_.1}
  #allocation0 [shape = 'u32[]', space=smem, size = 0x4, offset = 0x4, fixed_abs, tag = 'smem constant byte address 0x4 - core index']
  #allocation1 [shape = 'u32[144,128]{1,0:T(1,128)}', space=vmem, size = 0x12000, scoped, tag = 'internal scratch']
  %s0 = inlined_call_operand.vmem [shape: f32[2,16,4], index: 0, kind: input, shape index: {}]
  %s1 = inlined_call_operand.vmem [shape: bf16[2,16,16], index: 1, kind: input, shape index: {}]
  %s2 = inlined_call_operand.vmem [shape: f32[4,32], index: 2, kind: input, shape index: {}]
  %s3 = inlined_call_operand.vmem [shape: f32[4,32], index: 3, kind: input, shape index: {}]
  %s4 = inlined_call_operand.vmem [shape: f32[1,32], index: 4, kind: input, shape index: {}]
  %s5 = inlined_call_operand.vmem [shape: f32[1,32], index: 5, kind: input, shape index: {}]
  %s6 = inlined_call_operand.vmem [shape: f32[1,32], index: 6, kind: input, shape index: {}]
  %s7 = inlined_call_operand.vmem [shape: f32[32,32], index: 7, kind: input, shape index: {}]
  %s8 = inlined_call_operand.vmem [shape: f32[32,32], index: 8, kind: input, shape index: {}]
  %s9 = inlined_call_operand.vmem [shape: f32[1,32], index: 9, kind: input, shape index: {}]
  %s10 = inlined_call_operand.vmem [shape: f32[1,32], index: 10, kind: input, shape index: {}]
  %s11 = inlined_call_operand.vmem [shape: f32[1,32], index: 11, kind: input, shape index: {}]
  %s12 = inlined_call_operand.vmem [shape: f32[32,16], index: 12, kind: input, shape index: {}]
  %s13 = inlined_call_operand.vmem [shape: f32[32,16], index: 13, kind: input, shape index: {}]
  %s14 = inlined_call_operand.vmem [shape: f32[1,16], index: 14, kind: input, shape index: {}]
  %s15 = inlined_call_operand.vmem [shape: f32[1,16], index: 15, kind: input, shape index: {}]
  %s16 = inlined_call_operand.vmem [shape: f32[1,16], index: 16, kind: input, shape index: {}]
  %s17 = inlined_call_operand.vmem [shape: f32[32,16], index: 17, kind: input, shape index: {}]
  %s18 = inlined_call_operand.vmem [shape: f32[32,16], index: 18, kind: input, shape index: {}]
  %s19 = inlined_call_operand.vmem [shape: f32[16,16], index: 19, kind: input, shape index: {}]
  %s20 = inlined_call_operand.vmem [shape: f32[1,16], index: 20, kind: input, shape index: {}]
  %s21 = inlined_call_operand.hbm [shape: f32[2,16,16], index: 21, kind: output, shape index: {}]
  %s22 = sld [smem:[#allocation0]]
  $region94: #{_lambda_.1} parent=0
    _
  %s24 = ssub.s32 1, %s22
  %s25 = scalar_select 0, %s24, %s22
  $region1: #{_lambda_.1} parent=0
    #allocation2 [shape = 'u8[16384]{0}', space=vmem, size = 0x4000, scoped, tag = 'output window, operand 0, single buffered']
    #allocation3 [shape = 's32[1]{0}', space=sflag, size = 0x4, scoped, tag = 'scoped memory for _lambda_.1']
    %26 = vsyncpa [#allocation3], 0
    // Predicated region
    $region2: #{_lambda_.1} parent=1 // pred_check
      _
    $region3: #{_lambda_.1} parent=1 // pred_check_branch
      %28 = sbr.rel (0) target = $region5
    $region4: #{_lambda_.1} parent=1 // pred_region
      _
    $region5: #{_lambda_.1} parent=1 // pred_fallthru
      _
    // Predicated region
    $region6: #{_lambda_.1} parent=1 // pred_check
      _
    $region7: #{_lambda_.1} parent=1 // pred_check_branch
      %30 = sbr.rel (0) target = $region9
    $region8: #{_lambda_.1} parent=1 // pred_region
      _
    $region9: #{_lambda_.1} parent=1 // pred_fallthru
      _
    // Predicated region
    $region10: #{_lambda_.1} parent=1 // pred_check
      _
    $region11: #{_lambda_.1} parent=1 // pred_check_branch
      %32 = sbr.rel (0) target = $region13
    $region12: #{_lambda_.1} parent=1 // pred_region
      _
    $region13: #{_lambda_.1} parent=1 // pred_fallthru
      _
    // Predicated region
    $region14: #{_lambda_.1} parent=1 // pred_check
      _
    $region15: #{_lambda_.1} parent=1 // pred_check_branch
      %34 = sbr.rel (0) target = $region17
    $region16: #{_lambda_.1} parent=1 // pred_region
      _
    $region17: #{_lambda_.1} parent=1 // pred_fallthru
      _
    // Predicated region
    $region18: #{_lambda_.1} parent=1 // pred_check
      _
    $region19: #{_lambda_.1} parent=1 // pred_check_branch
      %36 = sbr.rel (0) target = $region21
    $region20: #{_lambda_.1} parent=1 // pred_region
      _
    $region21: #{_lambda_.1} parent=1 // pred_fallthru
      _
    // Predicated region
    $region22: #{_lambda_.1} parent=1 // pred_check
      _
    $region23: #{_lambda_.1} parent=1 // pred_check_branch
      %38 = sbr.rel (0) target = $region25
    $region24: #{_lambda_.1} parent=1 // pred_region
      _
    $region25: #{_lambda_.1} parent=1 // pred_fallthru
      _
    // Predicated region
    $region26: #{_lambda_.1} parent=1 // pred_check
      _
    $region27: #{_lambda_.1} parent=1 // pred_check_branch
      %40 = sbr.rel (0) target = $region29
    $region28: #{_lambda_.1} parent=1 // pred_region
      _
    $region29: #{_lambda_.1} parent=1 // pred_fallthru
      _
    // Predicated region
    $region30: #{_lambda_.1} parent=1 // pred_check
      _
    $region31: #{_lambda_.1} parent=1 // pred_check_branch
      %42 = sbr.rel (0) target = $region33
    $region32: #{_lambda_.1} parent=1 // pred_region
      _
    $region33: #{_lambda_.1} parent=1 // pred_fallthru
      _
    // Predicated region
    $region34: #{_lambda_.1} parent=1 // pred_check
      _
    $region35: #{_lambda_.1} parent=1 // pred_check_branch
      %44 = sbr.rel (0) target = $region37
    $region36: #{_lambda_.1} parent=1 // pred_region
      _
    $region37: #{_lambda_.1} parent=1 // pred_fallthru
      _
    // Predicated region
    $region38: #{_lambda_.1} parent=1 // pred_check
      _
    $region39: #{_lambda_.1} parent=1 // pred_check_branch
      %46 = sbr.rel (0) target = $region41
    $region40: #{_lambda_.1} parent=1 // pred_region
      _
    $region41: #{_lambda_.1} parent=1 // pred_fallthru
      _
    // Predicated region
    $region42: #{_lambda_.1} parent=1 // pred_check
      _
    $region43: #{_lambda_.1} parent=1 // pred_check_branch
      %48 = sbr.rel (0) target = $region45
    $region44: #{_lambda_.1} parent=1 // pred_region
      _
    $region45: #{_lambda_.1} parent=1 // pred_fallthru
      _
    // Predicated region
    $region46: #{_lambda_.1} parent=1 // pred_check
      _
    $region47: #{_lambda_.1} parent=1 // pred_check_branch
      %50 = sbr.rel (0) target = $region49
    $region48: #{_lambda_.1} parent=1 // pred_region
      _
    $region49: #{_lambda_.1} parent=1 // pred_fallthru
      _
    // Predicated region
    $region50: #{_lambda_.1} parent=1 // pred_check
      _
    $region51: #{_lambda_.1} parent=1 // pred_check_branch
      %52 = sbr.rel (0) target = $region53
    $region52: #{_lambda_.1} parent=1 // pred_region
      _
    $region53: #{_lambda_.1} parent=1 // pred_fallthru
      _
    // Predicated region
    $region54: #{_lambda_.1} parent=1 // pred_check
      _
    $region55: #{_lambda_.1} parent=1 // pred_check_branch
      %54 = sbr.rel (0) target = $region57
    $region56: #{_lambda_.1} parent=1 // pred_region
      _
    $region57: #{_lambda_.1} parent=1 // pred_fallthru
      _
    // Predicated region
    $region58: #{_lambda_.1} parent=1 // pred_check
      _
    $region59: #{_lambda_.1} parent=1 // pred_check_branch
      %56 = sbr.rel (0) target = $region61
    $region60: #{_lambda_.1} parent=1 // pred_region
      _
    $region61: #{_lambda_.1} parent=1 // pred_fallthru
      _
    // Predicated region
    $region62: #{_lambda_.1} parent=1 // pred_check
      _
    $region63: #{_lambda_.1} parent=1 // pred_check_branch
      %58 = sbr.rel (0) target = $region65
    $region64: #{_lambda_.1} parent=1 // pred_region
      _
    $region65: #{_lambda_.1} parent=1 // pred_fallthru
      _
    // Predicated region
    $region66: #{_lambda_.1} parent=1 // pred_check
      _
    $region67: #{_lambda_.1} parent=1 // pred_check_branch
      %60 = sbr.rel (0) target = $region69
    $region68: #{_lambda_.1} parent=1 // pred_region
      _
    $region69: #{_lambda_.1} parent=1 // pred_fallthru
      _
    // Predicated region
    $region70: #{_lambda_.1} parent=1 // pred_check
      _
    $region71: #{_lambda_.1} parent=1 // pred_check_branch
      %62 = sbr.rel (0) target = $region73
    $region72: #{_lambda_.1} parent=1 // pred_region
      _
    $region73: #{_lambda_.1} parent=1 // pred_fallthru
      _
    // Predicated region
    $region74: #{_lambda_.1} parent=1 // pred_check
      _
    $region75: #{_lambda_.1} parent=1 // pred_check_branch
      %64 = sbr.rel (0) target = $region77
    $region76: #{_lambda_.1} parent=1 // pred_region
      _
    $region77: #{_lambda_.1} parent=1 // pred_fallthru
      _
    // Predicated region
    $region78: #{_lambda_.1} parent=1 // pred_check
      _
    $region79: #{_lambda_.1} parent=1 // pred_check_branch
      %66 = sbr.rel (0) target = $region81
    $region80: #{_lambda_.1} parent=1 // pred_region
      _
    $region81: #{_lambda_.1} parent=1 // pred_fallthru
      _
    // Predicated region
    $region82: #{_lambda_.1} parent=1 // pred_check
      _
    $region83: #{_lambda_.1} parent=1 // pred_check_branch
      %68 = sbr.rel (0) target = $region85
    $region84: #{_lambda_.1} parent=1 // pred_region
      _
    $region85: #{_lambda_.1} parent=1 // pred_fallthru
      _
    %v69 = vld [vmem:[%s0] sm:$0xff]
    %v70 = vld [vmem:[%s0 + $0x8] sm:$0xff]
    %v71 = vld [vmem:[%s0 + $0x10] sm:$0xff]
    %v72 = vld [vmem:[%s0 + $0x18] sm:$0xff]
    %v73 = vld [vmem:[%s1] sm:$0xf]
    %v74 = vld [vmem:[%s1 + $0x4] sm:$0xf]
    %v75 = vld [vmem:[%s1 + $0x8] sm:$0xf]
    %v76 = vld [vmem:[%s1 + $0xc] sm:$0xf]
    %v77 = vunpack.c.l.bf16 %v73
    %v78 = vunpack.c.l.bf16 %v74
    %v79 = vunpack.c.l.bf16 %v75
    %v80 = vunpack.c.l.bf16 %v76
    %vm81 = vcmask 130048
    %v82 = vsel %vm81, %v77, 0.0
    %83 = vadd.xlane.f32.xlu0 %v82
    %v84 = vpop.xlane.xlu0 %83
    %v85 = vsel %vm81, %v78, 0.0
    %86 = vadd.xlane.f32.xlu0 %v85
    %v87 = vpop.xlane.xlu0 %86
    %v88 = vsel %vm81, %v79, 0.0
    %89 = vadd.xlane.f32.xlu0 %v88
    %v90 = vpop.xlane.xlu0 %89
    %v91 = vsel %vm81, %v80, 0.0
    %92 = vadd.xlane.f32.xlu0 %v91
    %v93 = vpop.xlane.xlu0 %92
    %v94 = vmax.f32 %v84, 1.0
    %v95 = vmax.f32 %v87, 1.0
    %v96 = vmax.f32 %v90, 1.0
    %v97 = vmax.f32 %v93, 1.0
    %v98 = vrcp.pop %v94
    %v99 = vrcp.pop %v95
    %v100 = vrcp.pop %v96
    %v101 = vrcp.pop %v97
    %v102 = vmul.f32 %v94, %v98
    %v103 = vmul.f32 %v95, %v99
    %v104 = vmul.f32 %v96, %v100
    %v105 = vmul.f32 %v97, %v101
    %v106 = vsub.f32 2.0, %v102
    %v107 = vsub.f32 2.0, %v103
    %v108 = vsub.f32 2.0, %v104
    %v109 = vsub.f32 2.0, %v105
    %v110 = vmul.f32 %v98, %v106
    %v111 = vmul.f32 %v99, %v107
    %v112 = vmul.f32 %v100, %v108
    %v113 = vmul.f32 %v101, %v109
    %v115 = vsel %vm81, %v77, 0
    %v118 = vsel %vm81, %v78, 0
    %120 = vmatprep.subr.mxu0 0.0
    %121 = vmatpush1.msra.mxu0 %v69
    %122 = vmatprep.subr.mxu0 0.0
    %123 = vmatpush1.msra.mxu0 %v70
    %124 = vmatprep.subr.mxu0 0.0
    %125 = vmatpush1.msra.mxu0 0.0
    %126 = vmatprep.subr.mxu0 0.0
    %127 = vmatpush1.msra.mxu0 0.0
    %128 = vmatprep.subr.mxu0 0.0
    %129 = vmatpush1.msra.mxu0 0.0
    %130 = vmatprep.subr.mxu0 0.0
    %131 = vmatpush1.msra.mxu0 0.0
    %132 = vmatprep.subr.mxu0 0.0
    %133 = vmatpush1.msra.mxu0 0.0
    %134 = vmatprep.subr.mxu0 0.0
    %135 = vmatpush1.msra.mxu0 0.0
    %136 = vmatprep.subr.mxu0 0.0
    %137 = vmatpush1.msra.mxu0 0.0
    %138 = vmatprep.subr.mxu0 0.0
    %139 = vmatpush1.msra.mxu0 0.0
    %140 = vmatprep.subr.mxu0 0.0
    %141 = vmatpush1.msra.mxu0 0.0
    %142 = vmatprep.subr.mxu0 0.0
    %143 = vmatpush1.msra.mxu0 0.0
    %144 = vmatprep.subr.mxu0 0.0
    %145 = vmatpush1.msra.mxu0 0.0
    %146 = vmatprep.subr.mxu0 0.0
    %147 = vmatpush1.msra.mxu0 0.0
    %148 = vmatprep.subr.mxu0 0.0
    %149 = vmatpush1.msra.mxu0 0.0
    %150 = vmatprep.subr.mxu0 0.0
    %151 = vmatpush1.msra.mxu0 0.0
    %152 = vmatprep.subr.mxu0 0.0
    %153 = vmatpush1.msra.mxu0 0.0
    %154 = vmatprep.subr.mxu0 0.0
    %155 = vmatpush1.msra.mxu0 0.0
    %156 = vmatprep.subr.mxu0 0.0
    %157 = vmatpush1.msra.mxu0 0.0
    %158 = vmatprep.subr.mxu0 0.0
    %159 = vmatpush1.msra.mxu0 0.0
    %160 = vmatprep.subr.mxu0 0.0
    %161 = vmatpush1.msra.mxu0 0.0
    %162 = vmatprep.subr.mxu0 0.0
    %163 = vmatpush1.msra.mxu0 0.0
    %164 = vmatprep.subr.mxu0 0.0
    %165 = vmatpush1.msra.mxu0 0.0
    %166 = vmatprep.subr.mxu0 0.0
    %167 = vmatpush1.msra.mxu0 0.0
    %168 = vmatprep.subr.mxu0 0.0
    %169 = vmatpush1.msra.mxu0 0.0
    %170 = vmatprep.subr.mxu0 0.0
    %171 = vmatpush1.msra.mxu0 0.0
    %172 = vmatprep.subr.mxu0 0.0
    %173 = vmatpush1.msra.mxu0 0.0
    %174 = vmatprep.subr.mxu0 0.0
    %175 = vmatpush1.msra.mxu0 0.0
    %176 = vmatprep.subr.mxu0 0.0
    %177 = vmatpush1.msra.mxu0 0.0
    %178 = vmatprep.subr.mxu0 0.0
    %179 = vmatpush1.msra.mxu0 0.0
    %180 = vmatprep.subr.mxu0 0.0
    %181 = vmatpush1.msra.mxu0 0.0
    %182 = vmatprep.subr.mxu0 0.0
    %183 = vmatpush1.msra.mxu0 0.0
    %184 = vmatprep.mubr.f32.mxu0 0.0
    %185 = vmatmul.mubr.f32.gmra.mrb[0].mxu0 %v115
    %v186 = vpop.f32.mrb[0].mxu0
    %v187 = vadd.f32 0.0, %v186
    %v188 = vpop.f32.mrb[0].mxu0
    %189 = vmatprep.mubr.f32.mxu0 0.0
    %190 = vmatmul.mubr.f32.gmra.mrb[0].mxu0 %v118
    %v191 = vpop.f32.mrb[0].mxu0
    %v192 = vadd.f32 0.0, %v191
    %v193 = vpop.f32.mrb[0].mxu0
    %194 = vdwg.mxu0
    %v196 = vsel %vm81, %v79, 0
    %v199 = vsel %vm81, %v80, 0
    %201 = vmatprep.subr.mxu0 0.0
    %202 = vmatpush1.msra.mxu0 %v71
    %203 = vmatprep.subr.mxu0 0.0
    %204 = vmatpush1.msra.mxu0 %v72
    %205 = vmatprep.subr.mxu0 0.0
    %206 = vmatpush1.msra.mxu0 0.0
    %207 = vmatprep.subr.mxu0 0.0
    %208 = vmatpush1.msra.mxu0 0.0
    %209 = vmatprep.subr.mxu0 0.0
    %210 = vmatpush1.msra.mxu0 0.0
    %211 = vmatprep.subr.mxu0 0.0
    %212 = vmatpush1.msra.mxu0 0.0
    %213 = vmatprep.subr.mxu0 0.0
    %214 = vmatpush1.msra.mxu0 0.0
    %215 = vmatprep.subr.mxu0 0.0
    %216 = vmatpush1.msra.mxu0 0.0
    %217 = vmatprep.subr.mxu0 0.0
    %218 = vmatpush1.msra.mxu0 0.0
    %219 = vmatprep.subr.mxu0 0.0
    %220 = vmatpush1.msra.mxu0 0.0
    %221 = vmatprep.subr.mxu0 0.0
    %222 = vmatpush1.msra.mxu0 0.0
    %223 = vmatprep.subr.mxu0 0.0
    %224 = vmatpush1.msra.mxu0 0.0
    %225 = vmatprep.subr.mxu0 0.0
    %226 = vmatpush1.msra.mxu0 0.0
    %227 = vmatprep.subr.mxu0 0.0
    %228 = vmatpush1.msra.mxu0 0.0
    %229 = vmatprep.subr.mxu0 0.0
    %230 = vmatpush1.msra.mxu0 0.0
    %231 = vmatprep.subr.mxu0 0.0
    %232 = vmatpush1.msra.mxu0 0.0
    %233 = vmatprep.subr.mxu0 0.0
    %234 = vmatpush1.msra.mxu0 0.0
    %235 = vmatprep.subr.mxu0 0.0
    %236 = vmatpush1.msra.mxu0 0.0
    %237 = vmatprep.subr.mxu0 0.0
    %238 = vmatpush1.msra.mxu0 0.0
    %239 = vmatprep.subr.mxu0 0.0
    %240 = vmatpush1.msra.mxu0 0.0
    %241 = vmatprep.subr.mxu0 0.0
    %242 = vmatpush1.msra.mxu0 0.0
    %243 = vmatprep.subr.mxu0 0.0
    %244 = vmatpush1.msra.mxu0 0.0
    %245 = vmatprep.subr.mxu0 0.0
    %246 = vmatpush1.msra.mxu0 0.0
    %247 = vmatprep.subr.mxu0 0.0
    %248 = vmatpush1.msra.mxu0 0.0
    %249 = vmatprep.subr.mxu0 0.0
    %250 = vmatpush1.msra.mxu0 0.0
    %251 = vmatprep.subr.mxu0 0.0
    %252 = vmatpush1.msra.mxu0 0.0
    %253 = vmatprep.subr.mxu0 0.0
    %254 = vmatpush1.msra.mxu0 0.0
    %255 = vmatprep.subr.mxu0 0.0
    %256 = vmatpush1.msra.mxu0 0.0
    %257 = vmatprep.subr.mxu0 0.0
    %258 = vmatpush1.msra.mxu0 0.0
    %259 = vmatprep.subr.mxu0 0.0
    %260 = vmatpush1.msra.mxu0 0.0
    %261 = vmatprep.subr.mxu0 0.0
    %262 = vmatpush1.msra.mxu0 0.0
    %263 = vmatprep.subr.mxu0 0.0
    %264 = vmatpush1.msra.mxu0 0.0
    %265 = vmatprep.mubr.f32.mxu0 0.0
    %266 = vmatmul.mubr.f32.gmra.mrb[0].mxu0 %v196
    %v267 = vpop.f32.mrb[0].mxu0
    %v268 = vadd.f32 0.0, %v267
    %v269 = vpop.f32.mrb[0].mxu0
    %270 = vmatprep.mubr.f32.mxu0 0.0
    %271 = vmatmul.mubr.f32.gmra.mrb[0].mxu0 %v199
    %v272 = vpop.f32.mrb[0].mxu0
    %v273 = vadd.f32 0.0, %v272
    %v274 = vpop.f32.mrb[0].mxu0
    %275 = vdwg.mxu0
    %v276 = vmul.f32 %v187, %v110
    %v277 = vmul.f32 %v192, %v111
    %v278 = vmul.f32 %v268, %v112
    %v279 = vmul.f32 %v273, %v113
    %v280 = vld [vmem:[%s2] sm:$0xf]
    %v281 = vld [vmem:[%s3] sm:$0xf]
    %vm282 = vcmask 31744
    %v284 = vsel %vm282, %v69, 0
    %v287 = vsel %vm282, %v70, 0
    %v290 = vsel %vm282, %v71, 0
    %v293 = vsel %vm282, %v72, 0
    %vm295 = vcmask 1043456
    %v297 = vsel %vm295, %v281, 0
    %299 = vmatprep.subr.mxu0 0.0
    %300 = vmatpush1.msra.mxu0 %v297
    %301 = vmatprep.subr.mxu0 0.0
    %302 = vmatpush1.msra.mxu0 0.0
    %303 = vmatprep.subr.mxu0 0.0
    %304 = vmatpush1.msra.mxu0 0.0
    %305 = vmatprep.subr.mxu0 0.0
    %306 = vmatpush1.msra.mxu0 0.0
    %307 = vmatprep.subr.mxu0 0.0
    %308 = vmatpush1.msra.mxu0 0.0
    %309 = vmatprep.subr.mxu0 0.0
    %310 = vmatpush1.msra.mxu0 0.0
    %311 = vmatprep.subr.mxu0 0.0
    %312 = vmatpush1.msra.mxu0 0.0
    %313 = vmatprep.subr.mxu0 0.0
    %314 = vmatpush1.msra.mxu0 0.0
    %315 = vmatprep.subr.mxu0 0.0
    %316 = vmatpush1.msra.mxu0 0.0
    %317 = vmatprep.subr.mxu0 0.0
    %318 = vmatpush1.msra.mxu0 0.0
    %319 = vmatprep.subr.mxu0 0.0
    %320 = vmatpush1.msra.mxu0 0.0
    %321 = vmatprep.subr.mxu0 0.0
    %322 = vmatpush1.msra.mxu0 0.0
    %323 = vmatprep.subr.mxu0 0.0
    %324 = vmatpush1.msra.mxu0 0.0
    %325 = vmatprep.subr.mxu0 0.0
    %326 = vmatpush1.msra.mxu0 0.0
    %327 = vmatprep.subr.mxu0 0.0
    %328 = vmatpush1.msra.mxu0 0.0
    %329 = vmatprep.subr.mxu0 0.0
    %330 = vmatpush1.msra.mxu0 0.0
    %331 = vmatprep.subr.mxu0 0.0
    %332 = vmatpush1.msra.mxu0 0.0
    %333 = vmatprep.subr.mxu0 0.0
    %334 = vmatpush1.msra.mxu0 0.0
    %335 = vmatprep.subr.mxu0 0.0
    %336 = vmatpush1.msra.mxu0 0.0
    %337 = vmatprep.subr.mxu0 0.0
    %338 = vmatpush1.msra.mxu0 0.0
    %339 = vmatprep.subr.mxu0 0.0
    %340 = vmatpush1.msra.mxu0 0.0
    %341 = vmatprep.subr.mxu0 0.0
    %342 = vmatpush1.msra.mxu0 0.0
    %343 = vmatprep.subr.mxu0 0.0
    %344 = vmatpush1.msra.mxu0 0.0
    %345 = vmatprep.subr.mxu0 0.0
    %346 = vmatpush1.msra.mxu0 0.0
    %347 = vmatprep.subr.mxu0 0.0
    %348 = vmatpush1.msra.mxu0 0.0
    %349 = vmatprep.subr.mxu0 0.0
    %350 = vmatpush1.msra.mxu0 0.0
    %351 = vmatprep.subr.mxu0 0.0
    %352 = vmatpush1.msra.mxu0 0.0
    %353 = vmatprep.subr.mxu0 0.0
    %354 = vmatpush1.msra.mxu0 0.0
    %355 = vmatprep.subr.mxu0 0.0
    %356 = vmatpush1.msra.mxu0 0.0
    %357 = vmatprep.subr.mxu0 0.0
    %358 = vmatpush1.msra.mxu0 0.0
    %359 = vmatprep.subr.mxu0 0.0
    %360 = vmatpush1.msra.mxu0 0.0
    %361 = vmatprep.subr.mxu0 0.0
    %362 = vmatpush1.msra.mxu0 0.0
    %363 = vmatprep.mubr.f32.mxu0 0.0
    %364 = vmatmul.mubr.f32.gmra.mrb[0].mxu0 %v284
    %v365 = vpop.f32.mrb[0].mxu0
    %v366 = vadd.f32 0.0, %v365
    %v367 = vpop.f32.mrb[0].mxu0
    %368 = vmatprep.mubr.f32.mxu0 0.0
    %369 = vmatmul.mubr.f32.gmra.mrb[0].mxu0 %v287
    %v370 = vpop.f32.mrb[0].mxu0
    %v371 = vadd.f32 0.0, %v370
    %v372 = vpop.f32.mrb[0].mxu0
    %373 = vmatprep.mubr.f32.mxu0 0.0
    %374 = vmatmul.mubr.f32.gmra.mrb[0].mxu0 %v290
    %v375 = vpop.f32.mrb[0].mxu0
    %v376 = vadd.f32 0.0, %v375
    %v377 = vpop.f32.mrb[0].mxu0
    %378 = vmatprep.mubr.f32.mxu0 0.0
    %379 = vmatmul.mubr.f32.gmra.mrb[0].mxu0 %v293
    %v380 = vpop.f32.mrb[0].mxu0
    %v381 = vadd.f32 0.0, %v380
    %v382 = vpop.f32.mrb[0].mxu0
    %383 = vdwg.mxu0
    %v385 = vsel %vm282, %v276, 0
    %v388 = vsel %vm282, %v277, 0
    %v391 = vsel %vm282, %v278, 0
    %v394 = vsel %vm282, %v279, 0
    %v397 = vsel %vm295, %v280, 0
    %399 = vmatprep.subr.mxu0 0.0
    %400 = vmatpush1.msra.mxu0 %v397
    %401 = vmatprep.subr.mxu0 0.0
    %402 = vmatpush1.msra.mxu0 0.0
    %403 = vmatprep.subr.mxu0 0.0
    %404 = vmatpush1.msra.mxu0 0.0
    %405 = vmatprep.subr.mxu0 0.0
    %406 = vmatpush1.msra.mxu0 0.0
    %407 = vmatprep.subr.mxu0 0.0
    %408 = vmatpush1.msra.mxu0 0.0
    %409 = vmatprep.subr.mxu0 0.0
    %410 = vmatpush1.msra.mxu0 0.0
    %411 = vmatprep.subr.mxu0 0.0
    %412 = vmatpush1.msra.mxu0 0.0
    %413 = vmatprep.subr.mxu0 0.0
    %414 = vmatpush1.msra.mxu0 0.0
    %415 = vmatprep.subr.mxu0 0.0
    %416 = vmatpush1.msra.mxu0 0.0
    %417 = vmatprep.subr.mxu0 0.0
    %418 = vmatpush1.msra.mxu0 0.0
    %419 = vmatprep.subr.mxu0 0.0
    %420 = vmatpush1.msra.mxu0 0.0
    %421 = vmatprep.subr.mxu0 0.0
    %422 = vmatpush1.msra.mxu0 0.0
    %423 = vmatprep.subr.mxu0 0.0
    %424 = vmatpush1.msra.mxu0 0.0
    %425 = vmatprep.subr.mxu0 0.0
    %426 = vmatpush1.msra.mxu0 0.0
    %427 = vmatprep.subr.mxu0 0.0
    %428 = vmatpush1.msra.mxu0 0.0
    %429 = vmatprep.subr.mxu0 0.0
    %430 = vmatpush1.msra.mxu0 0.0
    %431 = vmatprep.subr.mxu0 0.0
    %432 = vmatpush1.msra.mxu0 0.0
    %433 = vmatprep.subr.mxu0 0.0
    %434 = vmatpush1.msra.mxu0 0.0
    %435 = vmatprep.subr.mxu0 0.0
    %436 = vmatpush1.msra.mxu0 0.0
    %437 = vmatprep.subr.mxu0 0.0
    %438 = vmatpush1.msra.mxu0 0.0
    %439 = vmatprep.subr.mxu0 0.0
    %440 = vmatpush1.msra.mxu0 0.0
    %441 = vmatprep.subr.mxu0 0.0
    %442 = vmatpush1.msra.mxu0 0.0
    %443 = vmatprep.subr.mxu0 0.0
    %444 = vmatpush1.msra.mxu0 0.0
    %445 = vmatprep.subr.mxu0 0.0
    %446 = vmatpush1.msra.mxu0 0.0
    %447 = vmatprep.subr.mxu0 0.0
    %448 = vmatpush1.msra.mxu0 0.0
    %449 = vmatprep.subr.mxu0 0.0
    %450 = vmatpush1.msra.mxu0 0.0
    %451 = vmatprep.subr.mxu0 0.0
    %452 = vmatpush1.msra.mxu0 0.0
    %453 = vmatprep.subr.mxu0 0.0
    %454 = vmatpush1.msra.mxu0 0.0
    %455 = vmatprep.subr.mxu0 0.0
    %456 = vmatpush1.msra.mxu0 0.0
    %457 = vmatprep.subr.mxu0 0.0
    %458 = vmatpush1.msra.mxu0 0.0
    %459 = vmatprep.subr.mxu0 0.0
    %460 = vmatpush1.msra.mxu0 0.0
    %461 = vmatprep.subr.mxu0 0.0
    %462 = vmatpush1.msra.mxu0 0.0
    %463 = vmatprep.mubr.f32.mxu0 0.0
    %464 = vmatmul.mubr.f32.gmra.mrb[0].mxu0 %v385
    %v465 = vpop.f32.mrb[0].mxu0
    %v466 = vadd.f32 %v366, %v465
    %v467 = vpop.f32.mrb[0].mxu0
    %468 = vmatprep.mubr.f32.mxu0 0.0
    %469 = vmatmul.mubr.f32.gmra.mrb[0].mxu0 %v388
    %v470 = vpop.f32.mrb[0].mxu0
    %v471 = vadd.f32 %v371, %v470
    %v472 = vpop.f32.mrb[0].mxu0
    %473 = vmatprep.mubr.f32.mxu0 0.0
    %474 = vmatmul.mubr.f32.gmra.mrb[0].mxu0 %v391
    %v475 = vpop.f32.mrb[0].mxu0
    %v476 = vadd.f32 %v376, %v475
    %v477 = vpop.f32.mrb[0].mxu0
    %478 = vmatprep.mubr.f32.mxu0 0.0
    %479 = vmatmul.mubr.f32.gmra.mrb[0].mxu0 %v394
    %v480 = vpop.f32.mrb[0].mxu0
    %v481 = vadd.f32 %v381, %v480
    %v482 = vpop.f32.mrb[0].mxu0
    %483 = vdwg.mxu0
    %v484 = vld [vmem:[%s4] sm:$0x1]
    %v486 = vlaneseq
    %v487 = vshrl.u32 %v486, 7
    %v488 = vsub.s32 0, %v487
    %v489 = vrot.slane %v484, %v488
    %v491 = vadd.f32 %v466, %v489
    %v492 = vadd.f32 %v471, %v489
    %v493 = vadd.f32 %v476, %v489
    %v494 = vadd.f32 %v481, %v489
    %v495 = vmax.f32 %v491, 0.0
    %v496 = vmax.f32 %v492, 0.0
    %v497 = vmax.f32 %v493, 0.0
    %v498 = vmax.f32 %v494, 0.0
    %vm499 = vcmask 261120
    %v500 = vsel %vm499, %v495, 0.0
    %v501 = vsel %vm499, %v496, 0.0
    %v502 = vadd.f32 %v500, %v501
    %v503 = vsel %vm499, %v497, 0.0
    %v504 = vadd.f32 %v502, %v503
    %v505 = vsel %vm499, %v498, 0.0
    %v506 = vadd.f32 %v504, %v505
    %v507 = vrot.slane %v506, 4
    %v508 = vadd.f32 %v506, %v507
    %v509 = vrot.slane %v508, 2
    %v510 = vadd.f32 %v508, %v509
    %v511 = vrot.slane %v510, 1
    %v512 = vadd.f32 %v510, %v511
    %v513 = vrcp.pop 32.0
    %v514 = vmul.f32 %v512, %v513
    %v515 = vsub.f32 %v495, %v514
    %v516 = vsub.f32 %v496, %v514
    %v517 = vsub.f32 %v497, %v514
    %v518 = vsub.f32 %v498, %v514
    %v519 = vmul.f32 %v515, %v515
    %v520 = vmul.f32 %v516, %v516
    %v521 = vmul.f32 %v517, %v517
    %v522 = vmul.f32 %v518, %v518
    %v523 = vsel %vm499, %v519, 0.0
    %v524 = vsel %vm499, %v520, 0.0
    %v525 = vadd.f32 %v523, %v524
    %v526 = vsel %vm499, %v521, 0.0
    %v527 = vadd.f32 %v525, %v526
    %v528 = vsel %vm499, %v522, 0.0
    %v529 = vadd.f32 %v527, %v528
    %v530 = vrot.slane %v529, 4
    %v531 = vadd.f32 %v529, %v530
    %v532 = vrot.slane %v531, 2
    %v533 = vadd.f32 %v531, %v532
    %v534 = vrot.slane %v533, 1
    %v535 = vadd.f32 %v533, %v534
    %v536 = vmul.f32 %v535, %v513
    %v537 = vld [vmem:[%s5] sm:$0x1]
    %v538 = vadd.f32 %v536, 1e-05
    %v539 = vrsqrt.pop %v538
    %v540 = vmul.f32 %v537, %v539
    %v542 = vlaneseq
    %v543 = vshrl.u32 %v542, 7
    %v544 = vsub.s32 0, %v543
    %v545 = vrot.slane %v540, %v544
    %v547 = vmul.f32 %v515, %v545
    %v548 = vmul.f32 %v516, %v545
    %v549 = vmul.f32 %v517, %v545
    %v550 = vmul.f32 %v518, %v545
    %v551 = vld [vmem:[%s6] sm:$0x1]
    %v553 = vlaneseq
    %v554 = vshrl.u32 %v553, 7
    %v555 = vsub.s32 0, %v554
    %v556 = vrot.slane %v551, %v555
    %v558 = vadd.f32 %v547, %v556
    %v559 = vadd.f32 %v548, %v556
    %v560 = vadd.f32 %v549, %v556
    %v561 = vadd.f32 %v550, %v556
    %562 = vmatprep.subr.mxu0 0.0
    %563 = vmatpush1.msra.mxu0 %v558
    %564 = vmatprep.subr.mxu0 0.0
    %565 = vmatpush1.msra.mxu0 %v559
    %566 = vmatprep.subr.mxu0 0.0
    %567 = vmatpush1.msra.mxu0 0.0
    %568 = vmatprep.subr.mxu0 0.0
    %569 = vmatpush1.msra.mxu0 0.0
    %570 = vmatprep.subr.mxu0 0.0
    %571 = vmatpush1.msra.mxu0 0.0
    %572 = vmatprep.subr.mxu0 0.0
    %573 = vmatpush1.msra.mxu0 0.0
    %574 = vmatprep.subr.mxu0 0.0
    %575 = vmatpush1.msra.mxu0 0.0
    %576 = vmatprep.subr.mxu0 0.0
    %577 = vmatpush1.msra.mxu0 0.0
    %578 = vmatprep.subr.mxu0 0.0
    %579 = vmatpush1.msra.mxu0 0.0
    %580 = vmatprep.subr.mxu0 0.0
    %581 = vmatpush1.msra.mxu0 0.0
    %582 = vmatprep.subr.mxu0 0.0
    %583 = vmatpush1.msra.mxu0 0.0
    %584 = vmatprep.subr.mxu0 0.0
    %585 = vmatpush1.msra.mxu0 0.0
    %586 = vmatprep.subr.mxu0 0.0
    %587 = vmatpush1.msra.mxu0 0.0
    %588 = vmatprep.subr.mxu0 0.0
    %589 = vmatpush1.msra.mxu0 0.0
    %590 = vmatprep.subr.mxu0 0.0
    %591 = vmatpush1.msra.mxu0 0.0
    %592 = vmatprep.subr.mxu0 0.0
    %593 = vmatpush1.msra.mxu0 0.0
    %594 = vmatprep.subr.mxu0 0.0
    %595 = vmatpush1.msra.mxu0 0.0
    %596 = vmatprep.subr.mxu0 0.0
    %597 = vmatpush1.msra.mxu0 0.0
    %598 = vmatprep.subr.mxu0 0.0
    %599 = vmatpush1.msra.mxu0 0.0
    %600 = vmatprep.subr.mxu0 0.0
    %601 = vmatpush1.msra.mxu0 0.0
    %602 = vmatprep.subr.mxu0 0.0
    %603 = vmatpush1.msra.mxu0 0.0
    %604 = vmatprep.subr.mxu0 0.0
    %605 = vmatpush1.msra.mxu0 0.0
    %606 = vmatprep.subr.mxu0 0.0
    %607 = vmatpush1.msra.mxu0 0.0
    %608 = vmatprep.subr.mxu0 0.0
    %609 = vmatpush1.msra.mxu0 0.0
    %610 = vmatprep.subr.mxu0 0.0
    %611 = vmatpush1.msra.mxu0 0.0
    %612 = vmatprep.subr.mxu0 0.0
    %613 = vmatpush1.msra.mxu0 0.0
    %614 = vmatprep.subr.mxu0 0.0
    %615 = vmatpush1.msra.mxu0 0.0
    %616 = vmatprep.subr.mxu0 0.0
    %617 = vmatpush1.msra.mxu0 0.0
    %618 = vmatprep.subr.mxu0 0.0
    %619 = vmatpush1.msra.mxu0 0.0
    %620 = vmatprep.subr.mxu0 0.0
    %621 = vmatpush1.msra.mxu0 0.0
    %622 = vmatprep.subr.mxu0 0.0
    %623 = vmatpush1.msra.mxu0 0.0
    %624 = vmatprep.subr.mxu0 0.0
    %625 = vmatpush1.msra.mxu0 0.0
    %626 = vmatprep.mubr.f32.mxu0 0.0
    %627 = vmatmul.mubr.f32.gmra.mrb[0].mxu0 %v115
    %v628 = vpop.f32.mrb[0].mxu0
    %v629 = vadd.f32 0.0, %v628
    %v630 = vpop.f32.mrb[0].mxu0
    %631 = vmatprep.mubr.f32.mxu0 0.0
    %632 = vmatmul.mubr.f32.gmra.mrb[0].mxu0 %v118
    %v633 = vpop.f32.mrb[0].mxu0
    %v634 = vadd.f32 0.0, %v633
    %v635 = vpop.f32.mrb[0].mxu0
    %636 = vdwg.mxu0
    %637 = vmatprep.subr.mxu0 0.0
    %638 = vmatpush1.msra.mxu0 %v560
    %639 = vmatprep.subr.mxu0 0.0
    %640 = vmatpush1.msra.mxu0 %v561
    %641 = vmatprep.subr.mxu0 0.0
    %642 = vmatpush1.msra.mxu0 0.0
    %643 = vmatprep.subr.mxu0 0.0
    %644 = vmatpush1.msra.mxu0 0.0
    %645 = vmatprep.subr.mxu0 0.0
    %646 = vmatpush1.msra.mxu0 0.0
    %647 = vmatprep.subr.mxu0 0.0
    %648 = vmatpush1.msra.mxu0 0.0
    %649 = vmatprep.subr.mxu0 0.0
    %650 = vmatpush1.msra.mxu0 0.0
    %651 = vmatprep.subr.mxu0 0.0
    %652 = vmatpush1.msra.mxu0 0.0
    %653 = vmatprep.subr.mxu0 0.0
    %654 = vmatpush1.msra.mxu0 0.0
    %655 = vmatprep.subr.mxu0 0.0
    %656 = vmatpush1.msra.mxu0 0.0
    %657 = vmatprep.subr.mxu0 0.0
    %658 = vmatpush1.msra.mxu0 0.0
    %659 = vmatprep.subr.mxu0 0.0
    %660 = vmatpush1.msra.mxu0 0.0
    %661 = vmatprep.subr.mxu0 0.0
    %662 = vmatpush1.msra.mxu0 0.0
    %663 = vmatprep.subr.mxu0 0.0
    %664 = vmatpush1.msra.mxu0 0.0
    %665 = vmatprep.subr.mxu0 0.0
    %666 = vmatpush1.msra.mxu0 0.0
    %667 = vmatprep.subr.mxu0 0.0
    %668 = vmatpush1.msra.mxu0 0.0
    %669 = vmatprep.subr.mxu0 0.0
    %670 = vmatpush1.msra.mxu0 0.0
    %671 = vmatprep.subr.mxu0 0.0
    %672 = vmatpush1.msra.mxu0 0.0
    %673 = vmatprep.subr.mxu0 0.0
    %674 = vmatpush1.msra.mxu0 0.0
    %675 = vmatprep.subr.mxu0 0.0
    %676 = vmatpush1.msra.mxu0 0.0
    %677 = vmatprep.subr.mxu0 0.0
    %678 = vmatpush1.msra.mxu0 0.0
    %679 = vmatprep.subr.mxu0 0.0
    %680 = vmatpush1.msra.mxu0 0.0
    %681 = vmatprep.subr.mxu0 0.0
    %682 = vmatpush1.msra.mxu0 0.0
    %683 = vmatprep.subr.mxu0 0.0
    %684 = vmatpush1.msra.mxu0 0.0
    %685 = vmatprep.subr.mxu0 0.0
    %686 = vmatpush1.msra.mxu0 0.0
    %687 = vmatprep.subr.mxu0 0.0
    %688 = vmatpush1.msra.mxu0 0.0
    %689 = vmatprep.subr.mxu0 0.0
    %690 = vmatpush1.msra.mxu0 0.0
    %691 = vmatprep.subr.mxu0 0.0
    %692 = vmatpush1.msra.mxu0 0.0
    %693 = vmatprep.subr.mxu0 0.0
    %694 = vmatpush1.msra.mxu0 0.0
    %695 = vmatprep.subr.mxu0 0.0
    %696 = vmatpush1.msra.mxu0 0.0
    %697 = vmatprep.subr.mxu0 0.0
    %698 = vmatpush1.msra.mxu0 0.0
    %699 = vmatprep.subr.mxu0 0.0
    %700 = vmatpush1.msra.mxu0 0.0
    %701 = vmatprep.mubr.f32.mxu0 0.0
    %702 = vmatmul.mubr.f32.gmra.mrb[0].mxu0 %v196
    %v703 = vpop.f32.mrb[0].mxu0
    %v704 = vadd.f32 0.0, %v703
    %v705 = vpop.f32.mrb[0].mxu0
    %706 = vmatprep.mubr.f32.mxu0 0.0
    %707 = vmatmul.mubr.f32.gmra.mrb[0].mxu0 %v199
    %v708 = vpop.f32.mrb[0].mxu0
    %v709 = vadd.f32 0.0, %v708
    %v710 = vpop.f32.mrb[0].mxu0
    %711 = vdwg.mxu0
    %v712 = vmul.f32 %v629, %v110
    %v713 = vmul.f32 %v634, %v111
    %v714 = vmul.f32 %v704, %v112
    %v715 = vmul.f32 %v709, %v113
    %v716 = vld [vmem:[%s7] sm:$0xff]
    %v717 = vld [vmem:[%s7 + $0x8] sm:$0xff]
    %v718 = vld [vmem:[%s7 + $0x10] sm:$0xff]
    %v719 = vld [vmem:[%s7 + $0x18] sm:$0xff]
    %v720 = vld [vmem:[%s8] sm:$0xff]
    %v721 = vld [vmem:[%s8 + $0x8] sm:$0xff]
    %v722 = vld [vmem:[%s8 + $0x10] sm:$0xff]
    %v723 = vld [vmem:[%s8 + $0x18] sm:$0xff]
    %v725 = vsel %vm499, %v558, 0
    %v728 = vsel %vm499, %v559, 0
    %v731 = vsel %vm499, %v560, 0
    %v734 = vsel %vm499, %v561, 0
    %736 = vmatprep.subr.mxu0 0.0
    %737 = vmatpush1.msra.mxu0 %v720
    %738 = vmatprep.subr.mxu0 0.0
    %739 = vmatpush1.msra.mxu0 %v721
    %740 = vmatprep.subr.mxu0 0.0
    %741 = vmatpush1.msra.mxu0 %v722
    %742 = vmatprep.subr.mxu0 0.0
    %743 = vmatpush1.msra.mxu0 %v723
    %744 = vmatprep.subr.mxu0 0.0
    %745 = vmatpush1.msra.mxu0 0.0
    %746 = vmatprep.subr.mxu0 0.0
    %747 = vmatpush1.msra.mxu0 0.0
    %748 = vmatprep.subr.mxu0 0.0
    %749 = vmatpush1.msra.mxu0 0.0
    %750 = vmatprep.subr.mxu0 0.0
    %751 = vmatpush1.msra.mxu0 0.0
    %752 = vmatprep.subr.mxu0 0.0
    %753 = vmatpush1.msra.mxu0 0.0
    %754 = vmatprep.subr.mxu0 0.0
    %755 = vmatpush1.msra.mxu0 0.0
    %756 = vmatprep.subr.mxu0 0.0
    %757 = vmatpush1.msra.mxu0 0.0
    %758 = vmatprep.subr.mxu0 0.0
    %759 = vmatpush1.msra.mxu0 0.0
    %760 = vmatprep.subr.mxu0 0.0
    %761 = vmatpush1.msra.mxu0 0.0
    %762 = vmatprep.subr.mxu0 0.0
    %763 = vmatpush1.msra.mxu0 0.0
    %764 = vmatprep.subr.mxu0 0.0
    %765 = vmatpush1.msra.mxu0 0.0
    %766 = vmatprep.subr.mxu0 0.0
    %767 = vmatpush1.msra.mxu0 0.0
    %768 = vmatprep.subr.mxu0 0.0
    %769 = vmatpush1.msra.mxu0 0.0
    %770 = vmatprep.subr.mxu0 0.0
    %771 = vmatpush1.msra.mxu0 0.0
    %772 = vmatprep.subr.mxu0 0.0
    %773 = vmatpush1.msra.mxu0 0.0
    %774 = vmatprep.subr.mxu0 0.0
    %775 = vmatpush1.msra.mxu0 0.0
    %776 = vmatprep.subr.mxu0 0.0
    %777 = vmatpush1.msra.mxu0 0.0
    %778 = vmatprep.subr.mxu0 0.0
    %779 = vmatpush1.msra.mxu0 0.0
    %780 = vmatprep.subr.mxu0 0.0
    %781 = vmatpush1.msra.mxu0 0.0
    %782 = vmatprep.subr.mxu0 0.0
    %783 = vmatpush1.msra.mxu0 0.0
    %784 = vmatprep.subr.mxu0 0.0
    %785 = vmatpush1.msra.mxu0 0.0
    %786 = vmatprep.subr.mxu0 0.0
    %787 = vmatpush1.msra.mxu0 0.0
    %788 = vmatprep.subr.mxu0 0.0
    %789 = vmatpush1.msra.mxu0 0.0
    %790 = vmatprep.subr.mxu0 0.0
    %791 = vmatpush1.msra.mxu0 0.0
    %792 = vmatprep.subr.mxu0 0.0
    %793 = vmatpush1.msra.mxu0 0.0
    %794 = vmatprep.subr.mxu0 0.0
    %795 = vmatpush1.msra.mxu0 0.0
    %796 = vmatprep.subr.mxu0 0.0
    %797 = vmatpush1.msra.mxu0 0.0
    %798 = vmatprep.subr.mxu0 0.0
    %799 = vmatpush1.msra.mxu0 0.0
    %800 = vmatprep.mubr.f32.mxu0 0.0
    %801 = vmatmul.mubr.f32.gmra.mrb[0].mxu0 %v725
    %v802 = vpop.f32.mrb[0].mxu0
    %v803 = vadd.f32 0.0, %v802
    %v804 = vpop.f32.mrb[0].mxu0
    %805 = vmatprep.mubr.f32.mxu0 0.0
    %806 = vmatmul.mubr.f32.gmra.mrb[0].mxu0 %v728
    %v807 = vpop.f32.mrb[0].mxu0
    %v808 = vadd.f32 0.0, %v807
    %v809 = vpop.f32.mrb[0].mxu0
    %810 = vmatprep.mubr.f32.mxu0 0.0
    %811 = vmatmul.mubr.f32.gmra.mrb[0].mxu0 %v731
    %v812 = vpop.f32.mrb[0].mxu0
    %v813 = vadd.f32 0.0, %v812
    %v814 = vpop.f32.mrb[0].mxu0
    %815 = vmatprep.mubr.f32.mxu0 0.0
    %816 = vmatmul.mubr.f32.gmra.mrb[0].mxu0 %v734
    %v817 = vpop.f32.mrb[0].mxu0
    %v818 = vadd.f32 0.0, %v817
    %v819 = vpop.f32.mrb[0].mxu0
    %820 = vdwg.mxu0
    %v822 = vsel %vm499, %v712, 0
    %v825 = vsel %vm499, %v713, 0
    %v828 = vsel %vm499, %v714, 0
    %v831 = vsel %vm499, %v715, 0
    %833 = vmatprep.subr.mxu0 0.0
    %834 = vmatpush1.msra.mxu0 %v716
    %835 = vmatprep.subr.mxu0 0.0
    %836 = vmatpush1.msra.mxu0 %v717
    %837 = vmatprep.subr.mxu0 0.0
    %838 = vmatpush1.msra.mxu0 %v718
    %839 = vmatprep.subr.mxu0 0.0
    %840 = vmatpush1.msra.mxu0 %v719
    %841 = vmatprep.subr.mxu0 0.0
    %842 = vmatpush1.msra.mxu0 0.0
    %843 = vmatprep.subr.mxu0 0.0
    %844 = vmatpush1.msra.mxu0 0.0
    %845 = vmatprep.subr.mxu0 0.0
    %846 = vmatpush1.msra.mxu0 0.0
    %847 = vmatprep.subr.mxu0 0.0
    %848 = vmatpush1.msra.mxu0 0.0
    %849 = vmatprep.subr.mxu0 0.0
    %850 = vmatpush1.msra.mxu0 0.0
    %851 = vmatprep.subr.mxu0 0.0
    %852 = vmatpush1.msra.mxu0 0.0
    %853 = vmatprep.subr.mxu0 0.0
    %854 = vmatpush1.msra.mxu0 0.0
    %855 = vmatprep.subr.mxu0 0.0
    %856 = vmatpush1.msra.mxu0 0.0
    %857 = vmatprep.subr.mxu0 0.0
    %858 = vmatpush1.msra.mxu0 0.0
    %859 = vmatprep.subr.mxu0 0.0
    %860 = vmatpush1.msra.mxu0 0.0
    %861 = vmatprep.subr.mxu0 0.0
    %862 = vmatpush1.msra.mxu0 0.0
    %863 = vmatprep.subr.mxu0 0.0
    %864 = vmatpush1.msra.mxu0 0.0
    %865 = vmatprep.subr.mxu0 0.0
    %866 = vmatpush1.msra.mxu0 0.0
    %867 = vmatprep.subr.mxu0 0.0
    %868 = vmatpush1.msra.mxu0 0.0
    %869 = vmatprep.subr.mxu0 0.0
    %870 = vmatpush1.msra.mxu0 0.0
    %871 = vmatprep.subr.mxu0 0.0
    %872 = vmatpush1.msra.mxu0 0.0
    %873 = vmatprep.subr.mxu0 0.0
    %874 = vmatpush1.msra.mxu0 0.0
    %875 = vmatprep.subr.mxu0 0.0
    %876 = vmatpush1.msra.mxu0 0.0
    %877 = vmatprep.subr.mxu0 0.0
    %878 = vmatpush1.msra.mxu0 0.0
    %879 = vmatprep.subr.mxu0 0.0
    %880 = vmatpush1.msra.mxu0 0.0
    %881 = vmatprep.subr.mxu0 0.0
    %882 = vmatpush1.msra.mxu0 0.0
    %883 = vmatprep.subr.mxu0 0.0
    %884 = vmatpush1.msra.mxu0 0.0
    %885 = vmatprep.subr.mxu0 0.0
    %886 = vmatpush1.msra.mxu0 0.0
    %887 = vmatprep.subr.mxu0 0.0
    %888 = vmatpush1.msra.mxu0 0.0
    %889 = vmatprep.subr.mxu0 0.0
    %890 = vmatpush1.msra.mxu0 0.0
    %891 = vmatprep.subr.mxu0 0.0
    %892 = vmatpush1.msra.mxu0 0.0
    %893 = vmatprep.subr.mxu0 0.0
    %894 = vmatpush1.msra.mxu0 0.0
    %895 = vmatprep.subr.mxu0 0.0
    %896 = vmatpush1.msra.mxu0 0.0
    %897 = vmatprep.mubr.f32.mxu0 0.0
    %898 = vmatmul.mubr.f32.gmra.mrb[0].mxu0 %v822
    %v899 = vpop.f32.mrb[0].mxu0
    %v900 = vadd.f32 %v803, %v899
    %v901 = vpop.f32.mrb[0].mxu0
    %902 = vmatprep.mubr.f32.mxu0 0.0
    %903 = vmatmul.mubr.f32.gmra.mrb[0].mxu0 %v825
    %v904 = vpop.f32.mrb[0].mxu0
    %v905 = vadd.f32 %v808, %v904
    %v906 = vpop.f32.mrb[0].mxu0
    %907 = vmatprep.mubr.f32.mxu0 0.0
    %908 = vmatmul.mubr.f32.gmra.mrb[0].mxu0 %v828
    %v909 = vpop.f32.mrb[0].mxu0
    %v910 = vadd.f32 %v813, %v909
    %v911 = vpop.f32.mrb[0].mxu0
    %912 = vmatprep.mubr.f32.mxu0 0.0
    %913 = vmatmul.mubr.f32.gmra.mrb[0].mxu0 %v831
    %v914 = vpop.f32.mrb[0].mxu0
    %v915 = vadd.f32 %v818, %v914
    %v916 = vpop.f32.mrb[0].mxu0
    %917 = vdwg.mxu0
    %v918 = vld [vmem:[%s9] sm:$0x1]
    %v920 = vlaneseq
    %v921 = vshrl.u32 %v920, 7
    %v922 = vsub.s32 0, %v921
    %v923 = vrot.slane %v918, %v922
    %v925 = vadd.f32 %v900, %v923
    %v926 = vadd.f32 %v905, %v923
    %v927 = vadd.f32 %v910, %v923
    %v928 = vadd.f32 %v915, %v923
    %v929 = vmax.f32 %v925, 0.0
    %v930 = vmax.f32 %v926, 0.0
    %v931 = vmax.f32 %v927, 0.0
    %v932 = vmax.f32 %v928, 0.0
    %v933 = vsel %vm499, %v929, 0.0
    %v934 = vsel %vm499, %v930, 0.0
    %v935 = vadd.f32 %v933, %v934
    %v936 = vsel %vm499, %v931, 0.0
    %v937 = vadd.f32 %v935, %v936
    %v938 = vsel %vm499, %v932, 0.0
    %v939 = vadd.f32 %v937, %v938
    %v940 = vrot.slane %v939, 4
    %v941 = vadd.f32 %v939, %v940
    %v942 = vrot.slane %v941, 2
    %v943 = vadd.f32 %v941, %v942
    %v944 = vrot.slane %v943, 1
    %v945 = vadd.f32 %v943, %v944
    %v946 = vmul.f32 %v945, %v513
    %v947 = vsub.f32 %v929, %v946
    %v948 = vsub.f32 %v930, %v946
    %v949 = vsub.f32 %v931, %v946
    %v950 = vsub.f32 %v932, %v946
    %v951 = vmul.f32 %v947, %v947
    %v952 = vmul.f32 %v948, %v948
    %v953 = vmul.f32 %v949, %v949
    %v954 = vmul.f32 %v950, %v950
    %v955 = vsel %vm499, %v951, 0.0
    %v956 = vsel %vm499, %v952, 0.0
    %v957 = vadd.f32 %v955, %v956
    %v958 = vsel %vm499, %v953, 0.0
    %v959 = vadd.f32 %v957, %v958
    %v960 = vsel %vm499, %v954, 0.0
    %v961 = vadd.f32 %v959, %v960
    %v962 = vrot.slane %v961, 4
    %v963 = vadd.f32 %v961, %v962
    %v964 = vrot.slane %v963, 2
    %v965 = vadd.f32 %v963, %v964
    %v966 = vrot.slane %v965, 1
    %v967 = vadd.f32 %v965, %v966
    %v968 = vmul.f32 %v967, %v513
    %v969 = vld [vmem:[%s10] sm:$0x1]
    %v970 = vadd.f32 %v968, 1e-05
    %v971 = vrsqrt.pop %v970
    %v972 = vmul.f32 %v969, %v971
    %v974 = vlaneseq
    %v975 = vshrl.u32 %v974, 7
    %v976 = vsub.s32 0, %v975
    %v977 = vrot.slane %v972, %v976
    %v979 = vmul.f32 %v947, %v977
    %v980 = vmul.f32 %v948, %v977
    %v981 = vmul.f32 %v949, %v977
    %v982 = vmul.f32 %v950, %v977
    %v983 = vld [vmem:[%s11] sm:$0x1]
    %v985 = vlaneseq
    %v986 = vshrl.u32 %v985, 7
    %v987 = vsub.s32 0, %v986
    %v988 = vrot.slane %v983, %v987
    %v990 = vadd.f32 %v979, %v988
    %v991 = vadd.f32 %v980, %v988
    %v992 = vadd.f32 %v981, %v988
    %v993 = vadd.f32 %v982, %v988
    %994 = vmatprep.subr.mxu0 0.0
    %995 = vmatpush1.msra.mxu0 %v990
    %996 = vmatprep.subr.mxu0 0.0
    %997 = vmatpush1.msra.mxu0 %v991
    %998 = vmatprep.subr.mxu0 0.0
    %999 = vmatpush1.msra.mxu0 0.0
    %1000 = vmatprep.subr.mxu0 0.0
    %1001 = vmatpush1.msra.mxu0 0.0
    %1002 = vmatprep.subr.mxu0 0.0
    %1003 = vmatpush1.msra.mxu0 0.0
    %1004 = vmatprep.subr.mxu0 0.0
    %1005 = vmatpush1.msra.mxu0 0.0
    %1006 = vmatprep.subr.mxu0 0.0
    %1007 = vmatpush1.msra.mxu0 0.0
    %1008 = vmatprep.subr.mxu0 0.0
    %1009 = vmatpush1.msra.mxu0 0.0
    %1010 = vmatprep.subr.mxu0 0.0
    %1011 = vmatpush1.msra.mxu0 0.0
    %1012 = vmatprep.subr.mxu0 0.0
    %1013 = vmatpush1.msra.mxu0 0.0
    %1014 = vmatprep.subr.mxu0 0.0
    %1015 = vmatpush1.msra.mxu0 0.0
    %1016 = vmatprep.subr.mxu0 0.0
    %1017 = vmatpush1.msra.mxu0 0.0
    %1018 = vmatprep.subr.mxu0 0.0
    %1019 = vmatpush1.msra.mxu0 0.0
    %1020 = vmatprep.subr.mxu0 0.0
    %1021 = vmatpush1.msra.mxu0 0.0
    %1022 = vmatprep.subr.mxu0 0.0
    %1023 = vmatpush1.msra.mxu0 0.0
    %1024 = vmatprep.subr.mxu0 0.0
    %1025 = vmatpush1.msra.mxu0 0.0
    %1026 = vmatprep.subr.mxu0 0.0
    %1027 = vmatpush1.msra.mxu0 0.0
    %1028 = vmatprep.subr.mxu0 0.0
    %1029 = vmatpush1.msra.mxu0 0.0
    %1030 = vmatprep.subr.mxu0 0.0
    %1031 = vmatpush1.msra.mxu0 0.0
    %1032 = vmatprep.subr.mxu0 0.0
    %1033 = vmatpush1.msra.mxu0 0.0
    %1034 = vmatprep.subr.mxu0 0.0
    %1035 = vmatpush1.msra.mxu0 0.0
    %1036 = vmatprep.subr.mxu0 0.0
    %1037 = vmatpush1.msra.mxu0 0.0
    %1038 = vmatprep.subr.mxu0 0.0
    %1039 = vmatpush1.msra.mxu0 0.0
    %1040 = vmatprep.subr.mxu0 0.0
    %1041 = vmatpush1.msra.mxu0 0.0
    %1042 = vmatprep.subr.mxu0 0.0
    %1043 = vmatpush1.msra.mxu0 0.0
    %1044 = vmatprep.subr.mxu0 0.0
    %1045 = vmatpush1.msra.mxu0 0.0
    %1046 = vmatprep.subr.mxu0 0.0
    %1047 = vmatpush1.msra.mxu0 0.0
    %1048 = vmatprep.subr.mxu0 0.0
    %1049 = vmatpush1.msra.mxu0 0.0
    %1050 = vmatprep.subr.mxu0 0.0
    %1051 = vmatpush1.msra.mxu0 0.0
    %1052 = vmatprep.subr.mxu0 0.0
    %1053 = vmatpush1.msra.mxu0 0.0
    %1054 = vmatprep.subr.mxu0 0.0
    %1055 = vmatpush1.msra.mxu0 0.0
    %1056 = vmatprep.subr.mxu0 0.0
    %1057 = vmatpush1.msra.mxu0 0.0
    %1058 = vmatprep.mubr.f32.mxu0 0.0
    %1059 = vmatmul.mubr.f32.gmra.mrb[0].mxu0 %v115
    %v1060 = vpop.f32.mrb[0].mxu0
    %v1061 = vadd.f32 0.0, %v1060
    %v1062 = vpop.f32.mrb[0].mxu0
    %1063 = vmatprep.mubr.f32.mxu0 0.0
    %1064 = vmatmul.mubr.f32.gmra.mrb[0].mxu0 %v118
    %v1065 = vpop.f32.mrb[0].mxu0
    %v1066 = vadd.f32 0.0, %v1065
    %v1067 = vpop.f32.mrb[0].mxu0
    %1068 = vdwg.mxu0
    %1069 = vmatprep.subr.mxu0 0.0
    %1070 = vmatpush1.msra.mxu0 %v992
    %1071 = vmatprep.subr.mxu0 0.0
    %1072 = vmatpush1.msra.mxu0 %v993
    %1073 = vmatprep.subr.mxu0 0.0
    %1074 = vmatpush1.msra.mxu0 0.0
    %1075 = vmatprep.subr.mxu0 0.0
    %1076 = vmatpush1.msra.mxu0 0.0
    %1077 = vmatprep.subr.mxu0 0.0
    %1078 = vmatpush1.msra.mxu0 0.0
    %1079 = vmatprep.subr.mxu0 0.0
    %1080 = vmatpush1.msra.mxu0 0.0
    %1081 = vmatprep.subr.mxu0 0.0
    %1082 = vmatpush1.msra.mxu0 0.0
    %1083 = vmatprep.subr.mxu0 0.0
    %1084 = vmatpush1.msra.mxu0 0.0
    %1085 = vmatprep.subr.mxu0 0.0
    %1086 = vmatpush1.msra.mxu0 0.0
    %1087 = vmatprep.subr.mxu0 0.0
    %1088 = vmatpush1.msra.mxu0 0.0
    %1089 = vmatprep.subr.mxu0 0.0
    %1090 = vmatpush1.msra.mxu0 0.0
    %1091 = vmatprep.subr.mxu0 0.0
    %1092 = vmatpush1.msra.mxu0 0.0
    %1093 = vmatprep.subr.mxu0 0.0
    %1094 = vmatpush1.msra.mxu0 0.0
    %1095 = vmatprep.subr.mxu0 0.0
    %1096 = vmatpush1.msra.mxu0 0.0
    %1097 = vmatprep.subr.mxu0 0.0
    %1098 = vmatpush1.msra.mxu0 0.0
    %1099 = vmatprep.subr.mxu0 0.0
    %1100 = vmatpush1.msra.mxu0 0.0
    %1101 = vmatprep.subr.mxu0 0.0
    %1102 = vmatpush1.msra.mxu0 0.0
    %1103 = vmatprep.subr.mxu0 0.0
    %1104 = vmatpush1.msra.mxu0 0.0
    %1105 = vmatprep.subr.mxu0 0.0
    %1106 = vmatpush1.msra.mxu0 0.0
    %1107 = vmatprep.subr.mxu0 0.0
    %1108 = vmatpush1.msra.mxu0 0.0
    %1109 = vmatprep.subr.mxu0 0.0
    %1110 = vmatpush1.msra.mxu0 0.0
    %1111 = vmatprep.subr.mxu0 0.0
    %1112 = vmatpush1.msra.mxu0 0.0
    %1113 = vmatprep.subr.mxu0 0.0
    %1114 = vmatpush1.msra.mxu0 0.0
    %1115 = vmatprep.subr.mxu0 0.0
    %1116 = vmatpush1.msra.mxu0 0.0
    %1117 = vmatprep.subr.mxu0 0.0
    %1118 = vmatpush1.msra.mxu0 0.0
    %1119 = vmatprep.subr.mxu0 0.0
    %1120 = vmatpush1.msra.mxu0 0.0
    %1121 = vmatprep.subr.mxu0 0.0
    %1122 = vmatpush1.msra.mxu0 0.0
    %1123 = vmatprep.subr.mxu0 0.0
    %1124 = vmatpush1.msra.mxu0 0.0
    %1125 = vmatprep.subr.mxu0 0.0
    %1126 = vmatpush1.msra.mxu0 0.0
    %1127 = vmatprep.subr.mxu0 0.0
    %1128 = vmatpush1.msra.mxu0 0.0
    %1129 = vmatprep.subr.mxu0 0.0
    %1130 = vmatpush1.msra.mxu0 0.0
    %1131 = vmatprep.subr.mxu0 0.0
    %1132 = vmatpush1.msra.mxu0 0.0
    %1133 = vmatprep.mubr.f32.mxu0 0.0
    %1134 = vmatmul.mubr.f32.gmra.mrb[0].mxu0 %v196
    %v1135 = vpop.f32.mrb[0].mxu0
    %v1136 = vadd.f32 0.0, %v1135
    %v1137 = vpop.f32.mrb[0].mxu0
    %1138 = vmatprep.mubr.f32.mxu0 0.0
    %1139 = vmatmul.mubr.f32.gmra.mrb[0].mxu0 %v199
    %v1140 = vpop.f32.mrb[0].mxu0
    %v1141 = vadd.f32 0.0, %v1140
    %v1142 = vpop.f32.mrb[0].mxu0
    %1143 = vdwg.mxu0
    %v1144 = vmul.f32 %v1061, %v110
    %v1145 = vmul.f32 %v1066, %v111
    %v1146 = vmul.f32 %v1136, %v112
    %v1147 = vmul.f32 %v1141, %v113
    %v1148 = vld [vmem:[%s12] sm:$0xff]
    %v1149 = vld [vmem:[%s12 + $0x8] sm:$0xff]
    %v1150 = vld [vmem:[%s12 + $0x10] sm:$0xff]
    %v1151 = vld [vmem:[%s12 + $0x18] sm:$0xff]
    %v1152 = vld [vmem:[%s13] sm:$0xff]
    %v1153 = vld [vmem:[%s13 + $0x8] sm:$0xff]
    %v1154 = vld [vmem:[%s13 + $0x10] sm:$0xff]
    %v1155 = vld [vmem:[%s13 + $0x18] sm:$0xff]
    %v1157 = vsel %vm499, %v990, 0
    %v1160 = vsel %vm499, %v991, 0
    %v1163 = vsel %vm499, %v992, 0
    %v1166 = vsel %vm499, %v993, 0
    %1168 = vmatprep.subr.mxu0 0.0
    %1169 = vmatpush1.msra.mxu0 %v1152
    %1170 = vmatprep.subr.mxu0 0.0
    %1171 = vmatpush1.msra.mxu0 %v1153
    %1172 = vmatprep.subr.mxu0 0.0
    %1173 = vmatpush1.msra.mxu0 %v1154
    %1174 = vmatprep.subr.mxu0 0.0
    %1175 = vmatpush1.msra.mxu0 %v1155
    %1176 = vmatprep.subr.mxu0 0.0
    %1177 = vmatpush1.msra.mxu0 0.0
    %1178 = vmatprep.subr.mxu0 0.0
    %1179 = vmatpush1.msra.mxu0 0.0
    %1180 = vmatprep.subr.mxu0 0.0
    %1181 = vmatpush1.msra.mxu0 0.0
    %1182 = vmatprep.subr.mxu0 0.0
    %1183 = vmatpush1.msra.mxu0 0.0
    %1184 = vmatprep.subr.mxu0 0.0
    %1185 = vmatpush1.msra.mxu0 0.0
    %1186 = vmatprep.subr.mxu0 0.0
    %1187 = vmatpush1.msra.mxu0 0.0
    %1188 = vmatprep.subr.mxu0 0.0
    %1189 = vmatpush1.msra.mxu0 0.0
    %1190 = vmatprep.subr.mxu0 0.0
    %1191 = vmatpush1.msra.mxu0 0.0
    %1192 = vmatprep.subr.mxu0 0.0
    %1193 = vmatpush1.msra.mxu0 0.0
    %1194 = vmatprep.subr.mxu0 0.0
    %1195 = vmatpush1.msra.mxu0 0.0
    %1196 = vmatprep.subr.mxu0 0.0
    %1197 = vmatpush1.msra.mxu0 0.0
    %1198 = vmatprep.subr.mxu0 0.0
    %1199 = vmatpush1.msra.mxu0 0.0
    %1200 = vmatprep.subr.mxu0 0.0
    %1201 = vmatpush1.msra.mxu0 0.0
    %1202 = vmatprep.subr.mxu0 0.0
    %1203 = vmatpush1.msra.mxu0 0.0
    %1204 = vmatprep.subr.mxu0 0.0
    %1205 = vmatpush1.msra.mxu0 0.0
    %1206 = vmatprep.subr.mxu0 0.0
    %1207 = vmatpush1.msra.mxu0 0.0
    %1208 = vmatprep.subr.mxu0 0.0
    %1209 = vmatpush1.msra.mxu0 0.0
    %1210 = vmatprep.subr.mxu0 0.0
    %1211 = vmatpush1.msra.mxu0 0.0
    %1212 = vmatprep.subr.mxu0 0.0
    %1213 = vmatpush1.msra.mxu0 0.0
    %1214 = vmatprep.subr.mxu0 0.0
    %1215 = vmatpush1.msra.mxu0 0.0
    %1216 = vmatprep.subr.mxu0 0.0
    %1217 = vmatpush1.msra.mxu0 0.0
    %1218 = vmatprep.subr.mxu0 0.0
    %1219 = vmatpush1.msra.mxu0 0.0
    %1220 = vmatprep.subr.mxu0 0.0
    %1221 = vmatpush1.msra.mxu0 0.0
    %1222 = vmatprep.subr.mxu0 0.0
    %1223 = vmatpush1.msra.mxu0 0.0
    %1224 = vmatprep.subr.mxu0 0.0
    %1225 = vmatpush1.msra.mxu0 0.0
    %1226 = vmatprep.subr.mxu0 0.0
    %1227 = vmatpush1.msra.mxu0 0.0
    %1228 = vmatprep.subr.mxu0 0.0
    %1229 = vmatpush1.msra.mxu0 0.0
    %1230 = vmatprep.subr.mxu0 0.0
    %1231 = vmatpush1.msra.mxu0 0.0
    %1232 = vmatprep.mubr.f32.mxu0 0.0
    %1233 = vmatmul.mubr.f32.gmra.mrb[0].mxu0 %v1157
    %v1234 = vpop.f32.mrb[0].mxu0
    %v1235 = vadd.f32 0.0, %v1234
    %v1236 = vpop.f32.mrb[0].mxu0
    %1237 = vmatprep.mubr.f32.mxu0 0.0
    %1238 = vmatmul.mubr.f32.gmra.mrb[0].mxu0 %v1160
    %v1239 = vpop.f32.mrb[0].mxu0
    %v1240 = vadd.f32 0.0, %v1239
    %v1241 = vpop.f32.mrb[0].mxu0
    %1242 = vmatprep.mubr.f32.mxu0 0.0
    %1243 = vmatmul.mubr.f32.gmra.mrb[0].mxu0 %v1163
    %v1244 = vpop.f32.mrb[0].mxu0
    %v1245 = vadd.f32 0.0, %v1244
    %v1246 = vpop.f32.mrb[0].mxu0
    %1247 = vmatprep.mubr.f32.mxu0 0.0
    %1248 = vmatmul.mubr.f32.gmra.mrb[0].mxu0 %v1166
    %v1249 = vpop.f32.mrb[0].mxu0
    %v1250 = vadd.f32 0.0, %v1249
    %v1251 = vpop.f32.mrb[0].mxu0
    %1252 = vdwg.mxu0
    %v1254 = vsel %vm499, %v1144, 0
    %v1257 = vsel %vm499, %v1145, 0
    %v1260 = vsel %vm499, %v1146, 0
    %v1263 = vsel %vm499, %v1147, 0
    %1265 = vmatprep.subr.mxu0 0.0
    %1266 = vmatpush1.msra.mxu0 %v1148
    %1267 = vmatprep.subr.mxu0 0.0
    %1268 = vmatpush1.msra.mxu0 %v1149
    %1269 = vmatprep.subr.mxu0 0.0
    %1270 = vmatpush1.msra.mxu0 %v1150
    %1271 = vmatprep.subr.mxu0 0.0
    %1272 = vmatpush1.msra.mxu0 %v1151
    %1273 = vmatprep.subr.mxu0 0.0
    %1274 = vmatpush1.msra.mxu0 0.0
    %1275 = vmatprep.subr.mxu0 0.0
    %1276 = vmatpush1.msra.mxu0 0.0
    %1277 = vmatprep.subr.mxu0 0.0
    %1278 = vmatpush1.msra.mxu0 0.0
    %1279 = vmatprep.subr.mxu0 0.0
    %1280 = vmatpush1.msra.mxu0 0.0
    %1281 = vmatprep.subr.mxu0 0.0
    %1282 = vmatpush1.msra.mxu0 0.0
    %1283 = vmatprep.subr.mxu0 0.0
    %1284 = vmatpush1.msra.mxu0 0.0
    %1285 = vmatprep.subr.mxu0 0.0
    %1286 = vmatpush1.msra.mxu0 0.0
    %1287 = vmatprep.subr.mxu0 0.0
    %1288 = vmatpush1.msra.mxu0 0.0
    %1289 = vmatprep.subr.mxu0 0.0
    %1290 = vmatpush1.msra.mxu0 0.0
    %1291 = vmatprep.subr.mxu0 0.0
    %1292 = vmatpush1.msra.mxu0 0.0
    %1293 = vmatprep.subr.mxu0 0.0
    %1294 = vmatpush1.msra.mxu0 0.0
    %1295 = vmatprep.subr.mxu0 0.0
    %1296 = vmatpush1.msra.mxu0 0.0
    %1297 = vmatprep.subr.mxu0 0.0
    %1298 = vmatpush1.msra.mxu0 0.0
    %1299 = vmatprep.subr.mxu0 0.0
    %1300 = vmatpush1.msra.mxu0 0.0
    %1301 = vmatprep.subr.mxu0 0.0
    %1302 = vmatpush1.msra.mxu0 0.0
    %1303 = vmatprep.subr.mxu0 0.0
    %1304 = vmatpush1.msra.mxu0 0.0
    %1305 = vmatprep.subr.mxu0 0.0
    %1306 = vmatpush1.msra.mxu0 0.0
    %1307 = vmatprep.subr.mxu0 0.0
    %1308 = vmatpush1.msra.mxu0 0.0
    %1309 = vmatprep.subr.mxu0 0.0
    %1310 = vmatpush1.msra.mxu0 0.0
    %1311 = vmatprep.subr.mxu0 0.0
    %1312 = vmatpush1.msra.mxu0 0.0
    %1313 = vmatprep.subr.mxu0 0.0
    %1314 = vmatpush1.msra.mxu0 0.0
    %1315 = vmatprep.subr.mxu0 0.0
    %1316 = vmatpush1.msra.mxu0 0.0
    %1317 = vmatprep.subr.mxu0 0.0
    %1318 = vmatpush1.msra.mxu0 0.0
    %1319 = vmatprep.subr.mxu0 0.0
    %1320 = vmatpush1.msra.mxu0 0.0
    %1321 = vmatprep.subr.mxu0 0.0
    %1322 = vmatpush1.msra.mxu0 0.0
    %1323 = vmatprep.subr.mxu0 0.0
    %1324 = vmatpush1.msra.mxu0 0.0
    %1325 = vmatprep.subr.mxu0 0.0
    %1326 = vmatpush1.msra.mxu0 0.0
    %1327 = vmatprep.subr.mxu0 0.0
    %1328 = vmatpush1.msra.mxu0 0.0
    %1329 = vmatprep.mubr.f32.mxu0 0.0
    %1330 = vmatmul.mubr.f32.gmra.mrb[0].mxu0 %v1254
    %v1331 = vpop.f32.mrb[0].mxu0
    %v1332 = vadd.f32 %v1235, %v1331
    %v1333 = vpop.f32.mrb[0].mxu0
    %1334 = vmatprep.mubr.f32.mxu0 0.0
    %1335 = vmatmul.mubr.f32.gmra.mrb[0].mxu0 %v1257
    %v1336 = vpop.f32.mrb[0].mxu0
    %v1337 = vadd.f32 %v1240, %v1336
    %v1338 = vpop.f32.mrb[0].mxu0
    %1339 = vmatprep.mubr.f32.mxu0 0.0
    %1340 = vmatmul.mubr.f32.gmra.mrb[0].mxu0 %v1260
    %v1341 = vpop.f32.mrb[0].mxu0
    %v1342 = vadd.f32 %v1245, %v1341
    %v1343 = vpop.f32.mrb[0].mxu0
    %1344 = vmatprep.mubr.f32.mxu0 0.0
    %1345 = vmatmul.mubr.f32.gmra.mrb[0].mxu0 %v1263
    %v1346 = vpop.f32.mrb[0].mxu0
    %v1347 = vadd.f32 %v1250, %v1346
    %v1348 = vpop.f32.mrb[0].mxu0
    %1349 = vdwg.mxu0
    %v1350 = vld [vmem:[%s14] sm:$0x1]
    %v1352 = vlaneseq
    %v1353 = vshrl.u32 %v1352, 7
    %v1354 = vsub.s32 0, %v1353
    %v1355 = vrot.slane %v1350, %v1354
    %v1357 = vadd.f32 %v1332, %v1355
    %v1358 = vadd.f32 %v1337, %v1355
    %v1359 = vadd.f32 %v1342, %v1355
    %v1360 = vadd.f32 %v1347, %v1355
    %v1361 = vmax.f32 %v1357, 0.0
    %v1362 = vmax.f32 %v1358, 0.0
    %v1363 = vmax.f32 %v1359, 0.0
    %v1364 = vmax.f32 %v1360, 0.0
    %v1365 = vsel %vm81, %v1361, 0.0
    %v1366 = vsel %vm81, %v1362, 0.0
    %v1367 = vadd.f32 %v1365, %v1366
    %v1368 = vsel %vm81, %v1363, 0.0
    %v1369 = vadd.f32 %v1367, %v1368
    %v1370 = vsel %vm81, %v1364, 0.0
    %v1371 = vadd.f32 %v1369, %v1370
    %v1372 = vrot.slane %v1371, 4
    %v1373 = vadd.f32 %v1371, %v1372
    %v1374 = vrot.slane %v1373, 2
    %v1375 = vadd.f32 %v1373, %v1374
    %v1376 = vrot.slane %v1375, 1
    %v1377 = vadd.f32 %v1375, %v1376
    %v1378 = vmul.f32 %v1377, %v513
    %v1379 = vsub.f32 %v1361, %v1378
    %v1380 = vsub.f32 %v1362, %v1378
    %v1381 = vsub.f32 %v1363, %v1378
    %v1382 = vsub.f32 %v1364, %v1378
    %v1383 = vmul.f32 %v1379, %v1379
    %v1384 = vmul.f32 %v1380, %v1380
    %v1385 = vmul.f32 %v1381, %v1381
    %v1386 = vmul.f32 %v1382, %v1382
    %v1387 = vsel %vm81, %v1383, 0.0
    %v1388 = vsel %vm81, %v1384, 0.0
    %v1389 = vadd.f32 %v1387, %v1388
    %v1390 = vsel %vm81, %v1385, 0.0
    %v1391 = vadd.f32 %v1389, %v1390
    %v1392 = vsel %vm81, %v1386, 0.0
    %v1393 = vadd.f32 %v1391, %v1392
    %v1394 = vrot.slane %v1393, 4
    %v1395 = vadd.f32 %v1393, %v1394
    %v1396 = vrot.slane %v1395, 2
    %v1397 = vadd.f32 %v1395, %v1396
    %v1398 = vrot.slane %v1397, 1
    %v1399 = vadd.f32 %v1397, %v1398
    %v1400 = vmul.f32 %v1399, %v513
    %v1401 = vld [vmem:[%s15] sm:$0x1]
    %v1402 = vadd.f32 %v1400, 1e-05
    %v1403 = vrsqrt.pop %v1402
    %v1404 = vmul.f32 %v1401, %v1403
    %v1406 = vlaneseq
    %v1407 = vshrl.u32 %v1406, 7
    %v1408 = vsub.s32 0, %v1407
    %v1409 = vrot.slane %v1404, %v1408
    %v1411 = vmul.f32 %v1379, %v1409
    %v1412 = vmul.f32 %v1380, %v1409
    %v1413 = vmul.f32 %v1381, %v1409
    %v1414 = vmul.f32 %v1382, %v1409
    %v1415 = vld [vmem:[%s16] sm:$0x1]
    %v1417 = vlaneseq
    %v1418 = vshrl.u32 %v1417, 7
    %v1419 = vsub.s32 0, %v1418
    %v1420 = vrot.slane %v1415, %v1419
    %v1422 = vadd.f32 %v1411, %v1420
    %v1423 = vadd.f32 %v1412, %v1420
    %v1424 = vadd.f32 %v1413, %v1420
    %v1425 = vadd.f32 %v1414, %v1420
    %v1426 = vld [vmem:[%s17] sm:$0xff]
    %v1427 = vld [vmem:[%s17 + $0x8] sm:$0xff]
    %v1428 = vld [vmem:[%s17 + $0x10] sm:$0xff]
    %v1429 = vld [vmem:[%s17 + $0x18] sm:$0xff]
    %v1430 = vld [vmem:[%s18] sm:$0xff]
    %v1431 = vld [vmem:[%s18 + $0x8] sm:$0xff]
    %v1432 = vld [vmem:[%s18 + $0x10] sm:$0xff]
    %v1433 = vld [vmem:[%s18 + $0x18] sm:$0xff]
    %1434 = vmatprep.subr.mxu0 0.0
    %1435 = vmatpush1.msra.mxu0 %v1430
    %1436 = vmatprep.subr.mxu0 0.0
    %1437 = vmatpush1.msra.mxu0 %v1431
    %1438 = vmatprep.subr.mxu0 0.0
    %1439 = vmatpush1.msra.mxu0 %v1432
    %1440 = vmatprep.subr.mxu0 0.0
    %1441 = vmatpush1.msra.mxu0 %v1433
    %1442 = vmatprep.subr.mxu0 0.0
    %1443 = vmatpush1.msra.mxu0 0.0
    %1444 = vmatprep.subr.mxu0 0.0
    %1445 = vmatpush1.msra.mxu0 0.0
    %1446 = vmatprep.subr.mxu0 0.0
    %1447 = vmatpush1.msra.mxu0 0.0
    %1448 = vmatprep.subr.mxu0 0.0
    %1449 = vmatpush1.msra.mxu0 0.0
    %1450 = vmatprep.subr.mxu0 0.0
    %1451 = vmatpush1.msra.mxu0 0.0
    %1452 = vmatprep.subr.mxu0 0.0
    %1453 = vmatpush1.msra.mxu0 0.0
    %1454 = vmatprep.subr.mxu0 0.0
    %1455 = vmatpush1.msra.mxu0 0.0
    %1456 = vmatprep.subr.mxu0 0.0
    %1457 = vmatpush1.msra.mxu0 0.0
    %1458 = vmatprep.subr.mxu0 0.0
    %1459 = vmatpush1.msra.mxu0 0.0
    %1460 = vmatprep.subr.mxu0 0.0
    %1461 = vmatpush1.msra.mxu0 0.0
    %1462 = vmatprep.subr.mxu0 0.0
    %1463 = vmatpush1.msra.mxu0 0.0
    %1464 = vmatprep.subr.mxu0 0.0
    %1465 = vmatpush1.msra.mxu0 0.0
    %1466 = vmatprep.subr.mxu0 0.0
    %1467 = vmatpush1.msra.mxu0 0.0
    %1468 = vmatprep.subr.mxu0 0.0
    %1469 = vmatpush1.msra.mxu0 0.0
    %1470 = vmatprep.subr.mxu0 0.0
    %1471 = vmatpush1.msra.mxu0 0.0
    %1472 = vmatprep.subr.mxu0 0.0
    %1473 = vmatpush1.msra.mxu0 0.0
    %1474 = vmatprep.subr.mxu0 0.0
    %1475 = vmatpush1.msra.mxu0 0.0
    %1476 = vmatprep.subr.mxu0 0.0
    %1477 = vmatpush1.msra.mxu0 0.0
    %1478 = vmatprep.subr.mxu0 0.0
    %1479 = vmatpush1.msra.mxu0 0.0
    %1480 = vmatprep.subr.mxu0 0.0
    %1481 = vmatpush1.msra.mxu0 0.0
    %1482 = vmatprep.subr.mxu0 0.0
    %1483 = vmatpush1.msra.mxu0 0.0
    %1484 = vmatprep.subr.mxu0 0.0
    %1485 = vmatpush1.msra.mxu0 0.0
    %1486 = vmatprep.subr.mxu0 0.0
    %1487 = vmatpush1.msra.mxu0 0.0
    %1488 = vmatprep.subr.mxu0 0.0
    %1489 = vmatpush1.msra.mxu0 0.0
    %1490 = vmatprep.subr.mxu0 0.0
    %1491 = vmatpush1.msra.mxu0 0.0
    %1492 = vmatprep.subr.mxu0 0.0
    %1493 = vmatpush1.msra.mxu0 0.0
    %1494 = vmatprep.subr.mxu0 0.0
    %1495 = vmatpush1.msra.mxu0 0.0
    %1496 = vmatprep.subr.mxu0 0.0
    %1497 = vmatpush1.msra.mxu0 0.0
    %1498 = vmatprep.mubr.f32.mxu0 0.0
    %1499 = vmatmul.mubr.f32.gmra.mrb[0].mxu0 %v1157
    %v1500 = vpop.f32.mrb[0].mxu0
    %v1501 = vadd.f32 0.0, %v1500
    %v1502 = vpop.f32.mrb[0].mxu0
    %1503 = vmatprep.mubr.f32.mxu0 0.0
    %1504 = vmatmul.mubr.f32.gmra.mrb[0].mxu0 %v1160
    %v1505 = vpop.f32.mrb[0].mxu0
    %v1506 = vadd.f32 0.0, %v1505
    %v1507 = vpop.f32.mrb[0].mxu0
    %1508 = vmatprep.mubr.f32.mxu0 0.0
    %1509 = vmatmul.mubr.f32.gmra.mrb[0].mxu0 %v1163
    %v1510 = vpop.f32.mrb[0].mxu0
    %v1511 = vadd.f32 0.0, %v1510
    %v1512 = vpop.f32.mrb[0].mxu0
    %1513 = vmatprep.mubr.f32.mxu0 0.0
    %1514 = vmatmul.mubr.f32.gmra.mrb[0].mxu0 %v1166
    %v1515 = vpop.f32.mrb[0].mxu0
    %v1516 = vadd.f32 0.0, %v1515
    %v1517 = vpop.f32.mrb[0].mxu0
    %1518 = vdwg.mxu0
    %1519 = vmatprep.subr.mxu0 0.0
    %1520 = vmatpush1.msra.mxu0 %v1426
    %1521 = vmatprep.subr.mxu0 0.0
    %1522 = vmatpush1.msra.mxu0 %v1427
    %1523 = vmatprep.subr.mxu0 0.0
    %1524 = vmatpush1.msra.mxu0 %v1428
    %1525 = vmatprep.subr.mxu0 0.0
    %1526 = vmatpush1.msra.mxu0 %v1429
    %1527 = vmatprep.subr.mxu0 0.0
    %1528 = vmatpush1.msra.mxu0 0.0
    %1529 = vmatprep.subr.mxu0 0.0
    %1530 = vmatpush1.msra.mxu0 0.0
    %1531 = vmatprep.subr.mxu0 0.0
    %1532 = vmatpush1.msra.mxu0 0.0
    %1533 = vmatprep.subr.mxu0 0.0
    %1534 = vmatpush1.msra.mxu0 0.0
    %1535 = vmatprep.subr.mxu0 0.0
    %1536 = vmatpush1.msra.mxu0 0.0
    %1537 = vmatprep.subr.mxu0 0.0
    %1538 = vmatpush1.msra.mxu0 0.0
    %1539 = vmatprep.subr.mxu0 0.0
    %1540 = vmatpush1.msra.mxu0 0.0
    %1541 = vmatprep.subr.mxu0 0.0
    %1542 = vmatpush1.msra.mxu0 0.0
    %1543 = vmatprep.subr.mxu0 0.0
    %1544 = vmatpush1.msra.mxu0 0.0
    %1545 = vmatprep.subr.mxu0 0.0
    %1546 = vmatpush1.msra.mxu0 0.0
    %1547 = vmatprep.subr.mxu0 0.0
    %1548 = vmatpush1.msra.mxu0 0.0
    %1549 = vmatprep.subr.mxu0 0.0
    %1550 = vmatpush1.msra.mxu0 0.0
    %1551 = vmatprep.subr.mxu0 0.0
    %1552 = vmatpush1.msra.mxu0 0.0
    %1553 = vmatprep.subr.mxu0 0.0
    %1554 = vmatpush1.msra.mxu0 0.0
    %1555 = vmatprep.subr.mxu0 0.0
    %1556 = vmatpush1.msra.mxu0 0.0
    %1557 = vmatprep.subr.mxu0 0.0
    %1558 = vmatpush1.msra.mxu0 0.0
    %1559 = vmatprep.subr.mxu0 0.0
    %1560 = vmatpush1.msra.mxu0 0.0
    %1561 = vmatprep.subr.mxu0 0.0
    %1562 = vmatpush1.msra.mxu0 0.0
    %1563 = vmatprep.subr.mxu0 0.0
    %1564 = vmatpush1.msra.mxu0 0.0
    %1565 = vmatprep.subr.mxu0 0.0
    %1566 = vmatpush1.msra.mxu0 0.0
    %1567 = vmatprep.subr.mxu0 0.0
    %1568 = vmatpush1.msra.mxu0 0.0
    %1569 = vmatprep.subr.mxu0 0.0
    %1570 = vmatpush1.msra.mxu0 0.0
    %1571 = vmatprep.subr.mxu0 0.0
    %1572 = vmatpush1.msra.mxu0 0.0
    %1573 = vmatprep.subr.mxu0 0.0
    %1574 = vmatpush1.msra.mxu0 0.0
    %1575 = vmatprep.subr.mxu0 0.0
    %1576 = vmatpush1.msra.mxu0 0.0
    %1577 = vmatprep.subr.mxu0 0.0
    %1578 = vmatpush1.msra.mxu0 0.0
    %1579 = vmatprep.subr.mxu0 0.0
    %1580 = vmatpush1.msra.mxu0 0.0
    %1581 = vmatprep.subr.mxu0 0.0
    %1582 = vmatpush1.msra.mxu0 0.0
    %1583 = vmatprep.mubr.f32.mxu0 0.0
    %1584 = vmatmul.mubr.f32.gmra.mrb[0].mxu0 %v725
    %v1585 = vpop.f32.mrb[0].mxu0
    %v1586 = vadd.f32 %v1501, %v1585
    %v1587 = vpop.f32.mrb[0].mxu0
    %1588 = vmatprep.mubr.f32.mxu0 0.0
    %1589 = vmatmul.mubr.f32.gmra.mrb[0].mxu0 %v728
    %v1590 = vpop.f32.mrb[0].mxu0
    %v1591 = vadd.f32 %v1506, %v1590
    %v1592 = vpop.f32.mrb[0].mxu0
    %1593 = vmatprep.mubr.f32.mxu0 0.0
    %1594 = vmatmul.mubr.f32.gmra.mrb[0].mxu0 %v731
    %v1595 = vpop.f32.mrb[0].mxu0
    %v1596 = vadd.f32 %v1511, %v1595
    %v1597 = vpop.f32.mrb[0].mxu0
    %1598 = vmatprep.mubr.f32.mxu0 0.0
    %1599 = vmatmul.mubr.f32.gmra.mrb[0].mxu0 %v734
    %v1600 = vpop.f32.mrb[0].mxu0
    %v1601 = vadd.f32 %v1516, %v1600
    %v1602 = vpop.f32.mrb[0].mxu0
    %1603 = vdwg.mxu0
    %v1604 = vld [vmem:[%s19] sm:$0xff]
    %v1605 = vld [vmem:[%s19 + $0x8] sm:$0xff]
    %v1607 = vsel %vm81, %v1422, 0
    %v1610 = vsel %vm81, %v1423, 0
    %v1613 = vsel %vm81, %v1424, 0
    %v1616 = vsel %vm81, %v1425, 0
    %1618 = vmatprep.subr.mxu0 0.0
    %1619 = vmatpush1.msra.mxu0 %v1604
    %1620 = vmatprep.subr.mxu0 0.0
    %1621 = vmatpush1.msra.mxu0 %v1605
    %1622 = vmatprep.subr.mxu0 0.0
    %1623 = vmatpush1.msra.mxu0 0.0
    %1624 = vmatprep.subr.mxu0 0.0
    %1625 = vmatpush1.msra.mxu0 0.0
    %1626 = vmatprep.subr.mxu0 0.0
    %1627 = vmatpush1.msra.mxu0 0.0
    %1628 = vmatprep.subr.mxu0 0.0
    %1629 = vmatpush1.msra.mxu0 0.0
    %1630 = vmatprep.subr.mxu0 0.0
    %1631 = vmatpush1.msra.mxu0 0.0
    %1632 = vmatprep.subr.mxu0 0.0
    %1633 = vmatpush1.msra.mxu0 0.0
    %1634 = vmatprep.subr.mxu0 0.0
    %1635 = vmatpush1.msra.mxu0 0.0
    %1636 = vmatprep.subr.mxu0 0.0
    %1637 = vmatpush1.msra.mxu0 0.0
    %1638 = vmatprep.subr.mxu0 0.0
    %1639 = vmatpush1.msra.mxu0 0.0
    %1640 = vmatprep.subr.mxu0 0.0
    %1641 = vmatpush1.msra.mxu0 0.0
    %1642 = vmatprep.subr.mxu0 0.0
    %1643 = vmatpush1.msra.mxu0 0.0
    %1644 = vmatprep.subr.mxu0 0.0
    %1645 = vmatpush1.msra.mxu0 0.0
    %1646 = vmatprep.subr.mxu0 0.0
    %1647 = vmatpush1.msra.mxu0 0.0
    %1648 = vmatprep.subr.mxu0 0.0
    %1649 = vmatpush1.msra.mxu0 0.0
    %1650 = vmatprep.subr.mxu0 0.0
    %1651 = vmatpush1.msra.mxu0 0.0
    %1652 = vmatprep.subr.mxu0 0.0
    %1653 = vmatpush1.msra.mxu0 0.0
    %1654 = vmatprep.subr.mxu0 0.0
    %1655 = vmatpush1.msra.mxu0 0.0
    %1656 = vmatprep.subr.mxu0 0.0
    %1657 = vmatpush1.msra.mxu0 0.0
    %1658 = vmatprep.subr.mxu0 0.0
    %1659 = vmatpush1.msra.mxu0 0.0
    %1660 = vmatprep.subr.mxu0 0.0
    %1661 = vmatpush1.msra.mxu0 0.0
    %1662 = vmatprep.subr.mxu0 0.0
    %1663 = vmatpush1.msra.mxu0 0.0
    %1664 = vmatprep.subr.mxu0 0.0
    %1665 = vmatpush1.msra.mxu0 0.0
    %1666 = vmatprep.subr.mxu0 0.0
    %1667 = vmatpush1.msra.mxu0 0.0
    %1668 = vmatprep.subr.mxu0 0.0
    %1669 = vmatpush1.msra.mxu0 0.0
    %1670 = vmatprep.subr.mxu0 0.0
    %1671 = vmatpush1.msra.mxu0 0.0
    %1672 = vmatprep.subr.mxu0 0.0
    %1673 = vmatpush1.msra.mxu0 0.0
    %1674 = vmatprep.subr.mxu0 0.0
    %1675 = vmatpush1.msra.mxu0 0.0
    %1676 = vmatprep.subr.mxu0 0.0
    %1677 = vmatpush1.msra.mxu0 0.0
    %1678 = vmatprep.subr.mxu0 0.0
    %1679 = vmatpush1.msra.mxu0 0.0
    %1680 = vmatprep.subr.mxu0 0.0
    %1681 = vmatpush1.msra.mxu0 0.0
    %1682 = vmatprep.mubr.f32.mxu0 0.0
    %1683 = vmatmul.mubr.f32.gmra.mrb[0].mxu0 %v1607
    %v1684 = vpop.f32.mrb[0].mxu0
    %v1685 = vadd.f32 0.0, %v1684
    %v1686 = vpop.f32.mrb[0].mxu0
    %1687 = vmatprep.mubr.f32.mxu0 0.0
    %1688 = vmatmul.mubr.f32.gmra.mrb[0].mxu0 %v1610
    %v1689 = vpop.f32.mrb[0].mxu0
    %v1690 = vadd.f32 0.0, %v1689
    %v1691 = vpop.f32.mrb[0].mxu0
    %1692 = vmatprep.mubr.f32.mxu0 0.0
    %1693 = vmatmul.mubr.f32.gmra.mrb[0].mxu0 %v1613
    %v1694 = vpop.f32.mrb[0].mxu0
    %v1695 = vadd.f32 0.0, %v1694
    %v1696 = vpop.f32.mrb[0].mxu0
    %1697 = vmatprep.mubr.f32.mxu0 0.0
    %1698 = vmatmul.mubr.f32.gmra.mrb[0].mxu0 %v1616
    %v1699 = vpop.f32.mrb[0].mxu0
    %v1700 = vadd.f32 0.0, %v1699
    %v1701 = vpop.f32.mrb[0].mxu0
    %1702 = vdwg.mxu0
    %v1703 = vadd.f32 %v1586, %v1685
    %v1704 = vadd.f32 %v1591, %v1690
    %v1705 = vadd.f32 %v1596, %v1695
    %v1706 = vadd.f32 %v1601, %v1700
    %v1707 = vld [vmem:[%s20] sm:$0x1]
    %v1709 = vlaneseq
    %v1710 = vshrl.u32 %v1709, 7
    %v1711 = vsub.s32 0, %v1710
    %v1712 = vrot.slane %v1707, %v1711
    %v1714 = vadd.f32 %v1703, %v1712
    %v1715 = vadd.f32 %v1704, %v1712
    %v1716 = vadd.f32 %v1705, %v1712
    %v1717 = vadd.f32 %v1706, %v1712
    %v1718 = vmax.f32 %v1714, 0.0
    %v1719 = vmax.f32 %v1715, 0.0
    %v1720 = vmax.f32 %v1716, 0.0
    %v1721 = vmax.f32 %v1717, 0.0
    %1722 = vst.msk [vmem:[#allocation2] sm:$0xff] %vm81, %v1718
    %1723 = vst.msk [vmem:[#allocation2 + $0x8] sm:$0xff] %vm81, %v1719
    %1724 = vst.msk [vmem:[#allocation2 + $0x10] sm:$0xff] %vm81, %v1720
    %1725 = vst.msk [vmem:[#allocation2 + $0x18] sm:$0xff] %vm81, %v1721
    // Predicated region
    $region86: #{_lambda_.1} parent=1 // pred_check
      _
    $region87: #{_lambda_.1} parent=1 // pred_check_branch
      %1727 = sbr.rel (0) target = $region89
    $region88: #{_lambda_.1} parent=1 // pred_region
      %s1729 = ssub.s32 512, 512
      %1730 = vsyncadd [#allocation3], %s1729
      %s1731 = sshll.u32 [#allocation2], 4
      %s1732 = int_to_ptr.vmem [resolvable:$true] %s1731
      %1737 = dma.vmem_to_hbm [thread:$0]  %s1732, 512, %s21, [#allocation3], 128, 128, 8
    $region89: #{_lambda_.1} parent=1 // pred_fallthru
      _
    // Predicated region
    $region90: #{_lambda_.1} parent=1 // pred_check
      _
    $region91: #{_lambda_.1} parent=1 // pred_check_branch
      %1739 = sbr.rel (0) target = $region93
    $region92: #{_lambda_.1} parent=1 // pred_region
      %1740 = dma.done [#allocation3], 512
    $region93: #{_lambda_.1} parent=1 // pred_fallthru
      _
    %1741 = vsyncpa [#allocation3], 1

</llo_original>
